<compile_context>
chip_gen: v6e
topology: v6e:2x2x1
jax: 0.10.0
libtpu: 0.0.40
codegen_flags: <defaults>
</compile_context>

<pallas_src>
import functools

import jax
import jax.numpy as jnp
from jax.experimental import pallas as pl
from jax.experimental.pallas import tpu as pltpu


def _round_up(v, m):
    return ((v + m - 1) // m) * m


# ----------------------------- Pallas kernel -------------------------------- #

def res_layer_kernel(xs_ref, w1c0_ref, w1c1_ref, b1_ref, w2c_ref, b2_ref,
                     out_ref, y1p_ref, *, th, wo, wq, cp, c4):
    """One (image, row-block) step of the fused ResLayer.

    xs_ref : (th+3, wsp, c4)  bf16  space-to-depth input slab (1-row recompute halo
                                    on each side; zero rows at the image border)
    w1c0_ref: (2*c4, 2*cp)    bf16  conv1 taps (u=0,v=0)+(u=1,v=0) stacked along K,
                                    with the 1x1/s2 downsample as the 2nd cp columns
    w1c1_ref: (2*c4, cp)      bf16  conv1 taps (u=0,v=1)+(u=1,v=1) stacked along K
    b1_ref : (1, cp)          f32
    w2c_ref: (3, 3*cp, cp)    bf16  conv2: per dj, the 3 di taps stacked along K
    b2_ref : (1, cp)          f32
    out_ref: (th, wo, cp)     bf16  NHWC, channel-padded (lane dense)
    y1p_ref: (th+2, wq, cp)   bf16  VMEM scratch: relu(conv1) tile + zero halo
    """
    mh = (th + 2) * wo          # conv1 rows: tile + 1-row halo each side
    m = th * wo                 # conv2 / output rows

    # ---- conv1 (3x3 / s2) + fused 1x1 / s2 downsample: 2 MXU matmuls, K = 2*c4 ----
    # Pair the u=0 / u=1 row taps along K so the MXU sees K=256 (v6e/v7x 256-deep MXU).
    zc1 = jnp.concatenate([xs_ref[0:th + 2, :, :], xs_ref[1:th + 3, :, :]],
                          axis=-1)                                 # (th+2, wsp, 2*c4)

    # v = 0 window also feeds the downsample (extra cp output columns -> N = 2*cp).
    win0 = zc1[:, 0:wo, :].reshape(mh, 2 * c4)
    acc0 = jnp.dot(win0, w1c0_ref[...],
                   preferred_element_type=jnp.float32)             # (mh, 2*cp)
    win1 = zc1[:, 1:1 + wo, :].reshape(mh, 2 * c4)
    acc1 = acc0[:, :cp] + jnp.dot(win1, w1c1_ref[...],
                                  preferred_element_type=jnp.float32)

    y1 = jnp.maximum(acc1 + b1_ref[...], 0.0).reshape(th + 2, wo, cp)
    y1 = y1.astype(y1p_ref.dtype)

    # Stage relu(conv1) in VMEM.  Interior starts at sublane-aligned column 8;
    # only the small zero-halo columns are written (no full-buffer zero pass).
    y1p_ref[:, 0:8, :] = jnp.zeros((th + 2, 8, cp), y1p_ref.dtype)
    y1p_ref[:, 8:8 + wo, :] = y1
    y1p_ref[:, 8 + wo:wq, :] = jnp.zeros((th + 2, wq - wo - 8, cp), y1p_ref.dtype)

    # Out-of-image halo rows (conv2's zero padding) must be exactly zero, not
    # relu(bias): fix them only on the first / last row block.
    r = pl.program_id(1)

    @pl.when(r == 0)
    def _():
        y1p_ref[0:1, :, :] = jnp.zeros((1, wq, cp), y1p_ref.dtype)

    @pl.when(r == pl.num_programs(1) - 1)
    def _():
        y1p_ref[th + 1:th + 2, :, :] = jnp.zeros((1, wq, cp), y1p_ref.dtype)

    # ---- conv2 (3x3 / s1) + bias + residual + ReLU: 3 MXU matmuls, K = 3*cp ----
    # acc2 starts from the fused downsample (identity branch), interior rows only.
    acc2 = acc0[:, cp:].reshape(th + 2, wo, cp)[1:1 + th].reshape(m, cp)

    z = jnp.concatenate([y1p_ref[di:di + th, :, :] for di in range(3)],
                        axis=-1)                                   # (th, wq, 3*cp)
    for dj in range(3):
        win = z[:, 7 + dj:7 + dj + wo, :].reshape(m, 3 * cp)
        acc2 = acc2 + jnp.dot(win, w2c_ref[dj],
                              preferred_element_type=jnp.float32)

    out_ref[...] = jnp.maximum(acc2 + b2_ref[...], 0.0).reshape(
        th, wo, cp).astype(out_ref.dtype)


# ---------------------- parameter repack (hoisted, once) -------------------- #

def prepare_params(params):
    """One-time repack of torch-layout weights into MXU-friendly, lane-dense layouts."""
    w1, b1, w2, b2, wd = params
    cout, cin = int(w1.shape[0]), int(w1.shape[1])
    cin_p = _round_up(cin, 32)          # 4*cin_p is a multiple of 128 (lane dense)
    c4 = 4 * cin_p
    cp = _round_up(cout, 128)

    # conv1 (3x3, stride 2) over the space-to-depth input: tap (u, v) covers original
    # kernel offsets (di, dj) = (2u+a, 2v+b) with a, b in {0,1} and di, dj <= 2.
    taps = jnp.zeros((2, 2, c4, cp), jnp.float32)
    for u in range(2):
        for v in range(2):
            for a in range(2):
                for b in range(2):
                    di, dj = 2 * u + a, 2 * v + b
                    if di > 2 or dj > 2:
                        continue
                    off = (2 * a + b) * cin_p
                    taps = taps.at[u, v, off:off + cin, :cout].set(
                        jnp.transpose(w1[:, :, di, dj], (1, 0)))

    # Pair the two row taps (u=0, u=1) along K.  The v=0 pair also carries the 1x1
    # stride-2 downsample (phase-(1,1) channels of the u=0 slab) as extra N columns.
    ds = jnp.zeros((2 * c4, cp), jnp.float32)
    ds = ds.at[3 * cin_p:3 * cin_p + cin, :cout].set(
        jnp.transpose(wd[:, :, 0, 0], (1, 0)))
    w1c0 = jnp.concatenate(
        [jnp.concatenate([taps[0, 0], taps[1, 0]], axis=0), ds], axis=1)  # (2c4, 2cp)
    w1c1 = jnp.concatenate([taps[0, 1], taps[1, 1]], axis=0)              # (2c4, cp)

    # conv2 (3x3, stride 1): for each dj, stack the 3 di taps along K (K = 3*cp).
    w2c = jnp.zeros((3, 3 * cp, cp), jnp.float32)
    for dj in range(3):
        for di in range(3):
            w2c = w2c.at[dj, di * cp:di * cp + cout, :cout].set(
                jnp.transpose(w2[:, :, di, dj], (1, 0)))

    b1p = jnp.zeros((1, cp), jnp.float32).at[0, :cout].set(b1)
    b2p = jnp.zeros((1, cp), jnp.float32).at[0, :cout].set(b2)

    return dict(
        w1c0=w1c0.astype(jnp.bfloat16), w1c1=w1c1.astype(jnp.bfloat16),
        w2c=w2c.astype(jnp.bfloat16), b1p=b1p, b2p=b2p,
        cin=cin, cout=cout, cin_p=cin_p, c4=c4, cp=cp)


# ------------------------------- forward ------------------------------------ #

def make_res_layer_forward(prep, row_tile=8):
    cin, cout = prep["cin"], prep["cout"]
    cin_p, c4, cp = prep["cin_p"], prep["c4"], prep["cp"]
    w1c0, w1c1, b1p = prep["w1c0"], prep["w1c1"], prep["b1p"]
    w2c, b2p = prep["w2c"], prep["b2p"]

    def _const_spec(shape, index_map):
        # Constant-index weights/biases: single-buffer them (their index_map never
        # changes, so double-buffering only burns VMEM -- matters on v7x's 64 MiB).
        try:
            return pl.BlockSpec(shape, index_map, pipeline_mode=pl.Buffered(1))
        except (TypeError, AttributeError):
            return pl.BlockSpec(shape, index_map)

    @jax.jit
    def forward(x_nchw):
        N, C, H, W = x_nchw.shape
        assert C == cin, "channel mismatch"
        assert H % 2 == 0 and W % 2 == 0, "kernel assumes even spatial dims"
        ho, wo = H // 2, W // 2
        th = row_tile if ho >= row_tile else ho
        assert ho % th == 0, "row_tile must divide H//2"
        n_rb = ho // th
        hs, ws = ho + 1, wo + 1
        wsp = _round_up(ws, 8)                 # sublane-aligned s2d width
        wq = 8 + _round_up(wo + 1, 8)          # relu(conv1) scratch width (interior @ col 8)

        # bf16 first, then NCHW -> NHWC, channel pad, spatial pad(1), space-to-depth(2).
        x = jnp.transpose(x_nchw.astype(jnp.bfloat16), (0, 2, 3, 1))
        x = jnp.pad(x, ((0, 0), (1, 1), (1, 1), (0, cin_p - cin)))
        xs = x.reshape(N, hs, 2, ws, 2, cin_p)
        xs = xs.transpose(0, 1, 3, 2, 4, 5).reshape(N, hs, ws, c4)
        # Zero s2d row above/below the image + width pad, then overlapped row blocks
        # (th+3 rows each: 1-row recompute halo for relu(conv1) on each side).
        xs = jnp.pad(xs, ((0, 0), (1, 1), (0, wsp - ws), (0, 0)))
        row_idx = jnp.arange(n_rb)[:, None] * th + jnp.arange(th + 3)[None, :]
        xs_rb = jnp.take(xs, row_idx.reshape(-1), axis=1).reshape(
            N, n_rb, th + 3, wsp, c4)

        kernel = functools.partial(res_layer_kernel,
                                   th=th, wo=wo, wq=wq, cp=cp, c4=c4)
        mh, m = (th + 2) * wo, th * wo
        flops = N * n_rb * (2 * mh * (2 * c4) * (3 * cp) + 3 * 2 * m * (3 * cp) * cp)
        bytes_accessed = (xs_rb.size * 2 + N * ho * wo * cp * 2
                          + (w1c0.size + w1c1.size + w2c.size) * 2
                          + (b1p.size + b2p.size) * 4)

        out = pl.pallas_call(
            kernel,
            out_shape=jax.ShapeDtypeStruct((N, ho, wo, cp), jnp.bfloat16),
            grid=(N, n_rb),
            in_specs=[
                pl.BlockSpec((None, None, th + 3, wsp, c4),
                             lambda n, r: (n, r, 0, 0, 0)),          # xs row block
                _const_spec((2 * c4, 2 * cp), lambda n, r: (0, 0)),  # conv1 v=0 + ds
                _const_spec((2 * c4, cp), lambda n, r: (0, 0)),      # conv1 v=1
                _const_spec((1, cp), lambda n, r: (0, 0)),           # b1
                _const_spec((3, 3 * cp, cp), lambda n, r: (0, 0, 0)),  # conv2
                _const_spec((1, cp), lambda n, r: (0, 0)),           # b2
            ],
            out_specs=pl.BlockSpec((None, th, wo, cp), lambda n, r: (n, r, 0, 0)),
            scratch_shapes=[pltpu.VMEM((th + 2, wq, cp), jnp.bfloat16)],
            compiler_params=pltpu.CompilerParams(
                dimension_semantics=("parallel", "parallel"),  # megacore / v7x 2 TCs
                vmem_limit_bytes=48 * 1024 * 1024,  # row-blocked tiles fit v7x 64 MiB
            ),
            cost_estimate=pl.CostEstimate(
                flops=int(flops), transcendentals=0,
                bytes_accessed=int(bytes_accessed)),
        )(xs_rb, w1c0, w1c1, b1p, w2c, b2p)

        # bf16 NHWC channel-padded is what a fused next layer would consume; convert
        # to the module's NCHW float view only at the boundary.
        y = out[:, :, :, :cout]
        return jnp.transpose(y, (0, 3, 1, 2)).astype(jnp.float32)

    return forward


# ------------------- reference (plain JAX, same bf16 points) ----------------- #

def _conv_ref_bf16(x, w, stride, padding):
    return jax.lax.conv_general_dilated(
        x.astype(jnp.bfloat16), w.astype(jnp.bfloat16),
        window_strides=(stride, stride),
        padding=((padding, padding), (padding, padding)),
        dimension_numbers=("NCHW", "OIHW", "NCHW"),
        preferred_element_type=jnp.float32)


def res_layer_reference(x, params):
    """Mirrors the kernel's quantization points: bf16 operands, f32 accumulation."""
    w1, b1, w2, b2, wd = params
    identity = _conv_ref_bf16(x, wd, 2, 0)
    h = jnp.maximum(_conv_ref_bf16(x, w1, 2, 1) + b1.reshape(1, -1, 1, 1), 0.0)
    h = _conv_ref_bf16(h, w2, 1, 1) + b2.reshape(1, -1, 1, 1)
    return jnp.maximum(h + identity, 0.0)


# --------------------------------- main -------------------------------------- #

def _kaiming_uniform(key, shape):
    fan_in = 1
    for d in shape[1:]:
        fan_in *= d
    bound = (6.0 / fan_in) ** 0.5
    return jax.random.uniform(key, shape, jnp.float32, -bound, bound)


if __name__ == "__main__":
    in_f, out_f = 4, 8
    N, H, W = 2, 16, 16

    key = jax.random.PRNGKey(0)
    kx, k1, kb1, k2, kb2, kd = jax.random.split(key, 6)

    x = jax.random.normal(kx, (N, in_f, H, W), jnp.float32)

    w1 = _kaiming_uniform(k1, (out_f, in_f, 3, 3))
    b1 = jax.random.uniform(kb1, (out_f,), jnp.float32, -0.1, 0.1)
    w2 = _kaiming_uniform(k2, (out_f, out_f, 3, 3))
    b2 = jax.random.uniform(kb2, (out_f,), jnp.float32, -0.1, 0.1)
    wd = _kaiming_uniform(kd, (out_f, in_f, 1, 1))      # downsample 1x1, bias=False
    params = (w1, b1, w2, b2, wd)

    prep = prepare_params(params)                        # hoisted, once per model
    forward = make_res_layer_forward(prep, row_tile=4)   # H/2 = 8 -> 2 row blocks

    y = forward(x)
    jax.block_until_ready(y)

    y_ref = res_layer_reference(x, params)
    assert y.shape == (N, out_f, H // 2, W // 2), y.shape
    max_diff = float(jnp.max(jnp.abs(y - y_ref)))
    assert jnp.allclose(y, y_ref, atol=2e-2, rtol=2e-2), (
        "mismatch vs reference, max abs diff = %f" % max_diff)

    print("KERNEL_OK")
</pallas_src>

<mosaic_0001>
module attributes {stable_mosaic.version = 11 : i64} {
  func.func @res_layer_kernel(%arg0: i32, %arg1: i32, %arg2: memref<1x1x7x16x128xbf16, #tpu.memory_space<vmem>>, %arg3: memref<256x256xbf16, #tpu.memory_space<vmem>>, %arg4: memref<256x128xbf16, #tpu.memory_space<vmem>>, %arg5: memref<1x128xf32, #tpu.memory_space<vmem>>, %arg6: memref<3x384x128xbf16, #tpu.memory_space<vmem>>, %arg7: memref<1x128xf32, #tpu.memory_space<vmem>>, %arg8: memref<1x4x8x128xbf16, #tpu.memory_space<vmem>>, %arg9: memref<6x24x128xbf16, #tpu.memory_space<vmem>>) attributes {dimension_semantics = [#tpu.dimension_semantics<parallel>, #tpu.dimension_semantics<parallel>], iteration_bounds = array<i64: 2, 2>, scalar_prefetch = 0 : i64, scratch_operands = 1 : i64, tpu.core_type = #tpu.core_type<tc>, window_params = [{transform_indices = @transform_0, window_bounds = array<i64: 1, 1, 7, 16, 128>}, {pipeline_mode = #tpu.pipeline_mode<synchronous>, transform_indices = @transform_1, window_bounds = array<i64: 256, 256>}, {pipeline_mode = #tpu.pipeline_mode<synchronous>, transform_indices = @transform_2, window_bounds = array<i64: 256, 128>}, {pipeline_mode = #tpu.pipeline_mode<synchronous>, transform_indices = @transform_3, window_bounds = array<i64: 1, 128>}, {pipeline_mode = #tpu.pipeline_mode<synchronous>, transform_indices = @transform_4, window_bounds = array<i64: 3, 384, 128>}, {pipeline_mode = #tpu.pipeline_mode<synchronous>, transform_indices = @transform_5, window_bounds = array<i64: 1, 128>}, {transform_indices = @transform_6, window_bounds = array<i64: 1, 4, 8, 128>}]} {
    %c0 = arith.constant 0 : index
    %c0_0 = arith.constant 0 : index
    %c0_1 = arith.constant 0 : index
    %c0_2 = arith.constant 0 : index
    %c0_3 = arith.constant 0 : index
    %0 = vector.load %arg2[%c0, %c0_0, %c0_1, %c0_2, %c0_3] : memref<1x1x7x16x128xbf16, #tpu.memory_space<vmem>>, vector<1x1x6x16x128xbf16>
    %1 = vector.shape_cast %0 : vector<1x1x6x16x128xbf16> to vector<6x16x128xbf16>
    %c0_4 = arith.constant 0 : index
    %c0_5 = arith.constant 0 : index
    %c1 = arith.constant 1 : index
    %c0_6 = arith.constant 0 : index
    %c0_7 = arith.constant 0 : index
    %2 = vector.load %arg2[%c0_4, %c0_5, %c1, %c0_6, %c0_7] : memref<1x1x7x16x128xbf16, #tpu.memory_space<vmem>>, vector<1x1x6x16x128xbf16>
    %3 = vector.shape_cast %2 : vector<1x1x6x16x128xbf16> to vector<6x16x128xbf16>
    %4 = tpu.concatenate %1, %3 in 2 : vector<6x16x128xbf16>, vector<6x16x128xbf16> -> vector<6x16x256xbf16>
    %5 = vector.extract_strided_slice %4 {offsets = [0, 0, 0], sizes = [6, 8, 256], strides = [1, 1, 1]} : vector<6x16x256xbf16> to vector<6x8x256xbf16>
    %6 = vector.shape_cast %5 : vector<6x8x256xbf16> to vector<48x256xbf16>
    %c0_8 = arith.constant 0 : index
    %c0_9 = arith.constant 0 : index
    %7 = vector.load %arg3[%c0_8, %c0_9] : memref<256x256xbf16, #tpu.memory_space<vmem>>, vector<256x256xbf16>
    %cst = arith.constant dense<0.000000e+00> : vector<48x256xf32>
    %8 = tpu.matmul %6, %7, %cst {dimension_numbers = #tpu.dot_dimension_numbers<[1], [0], [0], [1], [0, 0, 1, 1], [], []>} : vector<48x256xbf16>, vector<256x256xbf16>, vector<48x256xf32> -> vector<48x256xf32>
    %9 = vector.extract_strided_slice %4 {offsets = [0, 1, 0], sizes = [6, 8, 256], strides = [1, 1, 1]} : vector<6x16x256xbf16> to vector<6x8x256xbf16>
    %10 = vector.shape_cast %9 : vector<6x8x256xbf16> to vector<48x256xbf16>
    %11 = vector.extract_strided_slice %8 {offsets = [0, 0], sizes = [48, 128], strides = [1, 1]} : vector<48x256xf32> to vector<48x128xf32>
    %c0_10 = arith.constant 0 : index
    %c0_11 = arith.constant 0 : index
    %12 = vector.load %arg4[%c0_10, %c0_11] : memref<256x128xbf16, #tpu.memory_space<vmem>>, vector<256x128xbf16>
    %cst_12 = arith.constant dense<0.000000e+00> : vector<48x128xf32>
    %13 = tpu.matmul %10, %12, %cst_12 {dimension_numbers = #tpu.dot_dimension_numbers<[1], [0], [0], [1], [0, 0, 1, 1], [], []>} : vector<48x256xbf16>, vector<256x128xbf16>, vector<48x128xf32> -> vector<48x128xf32>
    %14 = arith.addf %11, %13 : vector<48x128xf32>
    %c0_13 = arith.constant 0 : index
    %c0_14 = arith.constant 0 : index
    %15 = vector.load %arg5[%c0_13, %c0_14] : memref<1x128xf32, #tpu.memory_space<vmem>>, vector<1x128xf32>
    %16 = vector.broadcast %15 : vector<1x128xf32> to vector<48x128xf32>
    %17 = arith.addf %14, %16 : vector<48x128xf32>
    %cst_15 = arith.constant 0.000000e+00 : f32
    %18 = vector.broadcast %cst_15 : f32 to vector<48x128xf32>
    %19 = arith.maximumf %17, %18 : vector<48x128xf32>
    %20 = vector.shape_cast %19 : vector<48x128xf32> to vector<6x8x128xf32>
    %21 = arith.truncf %20 : vector<6x8x128xf32> to vector<6x8x128xbf16>
    %cst_16 = arith.constant 0.000000e+00 : bf16
    %22 = vector.broadcast %cst_16 : bf16 to vector<6x8x128xbf16>
    %c0_17 = arith.constant 0 : index
    %c0_18 = arith.constant 0 : index
    %c0_19 = arith.constant 0 : index
    %23 = vector.load %arg9[%c0_17, %c0_18, %c0_19] : memref<6x24x128xbf16, #tpu.memory_space<vmem>>, vector<6x8x128xbf16>
    tpu.vector_store %arg9[%c0_17, %c0_18, %c0_19], %22 {strides = array<i32>} : memref<6x24x128xbf16, #tpu.memory_space<vmem>>, vector<6x8x128xbf16>,
    %c0_20 = arith.constant 0 : index
    %c8 = arith.constant 8 : index
    %c0_21 = arith.constant 0 : index
    %24 = vector.load %arg9[%c0_20, %c8, %c0_21] : memref<6x24x128xbf16, #tpu.memory_space<vmem>>, vector<6x8x128xbf16>
    tpu.vector_store %arg9[%c0_20, %c8, %c0_21], %21 {strides = array<i32>} : memref<6x24x128xbf16, #tpu.memory_space<vmem>>, vector<6x8x128xbf16>,
    %cst_22 = arith.constant 0.000000e+00 : bf16
    %25 = vector.broadcast %cst_22 : bf16 to vector<6x8x128xbf16>
    %c0_23 = arith.constant 0 : index
    %c16 = arith.constant 16 : index
    %c0_24 = arith.constant 0 : index
    %26 = vector.load %arg9[%c0_23, %c16, %c0_24] : memref<6x24x128xbf16, #tpu.memory_space<vmem>>, vector<6x8x128xbf16>
    tpu.vector_store %arg9[%c0_23, %c16, %c0_24], %25 {strides = array<i32>} : memref<6x24x128xbf16, #tpu.memory_space<vmem>>, vector<6x8x128xbf16>,
    %c0_i32 = arith.constant 0 : i32
    %27 = arith.cmpi eq, %arg1, %c0_i32 : i32
    %28 = arith.extui %27 : i1 to i32
    %c0_i32_25 = arith.constant 0 : i32
    %29 = arith.cmpi ne, %28, %c0_i32_25 : i32
    scf.if %29 {
      %cst_54 = arith.constant 0.000000e+00 : bf16
      %69 = vector.broadcast %cst_54 : bf16 to vector<1x24x128xbf16>
      %c0_55 = arith.constant 0 : index
      %c0_56 = arith.constant 0 : index
      %c0_57 = arith.constant 0 : index
      %70 = vector.load %arg9[%c0_55, %c0_56, %c0_57] : memref<6x24x128xbf16, #tpu.memory_space<vmem>>, vector<1x24x128xbf16>
      tpu.vector_store %arg9[%c0_55, %c0_56, %c0_57], %69 {strides = array<i32>} : memref<6x24x128xbf16, #tpu.memory_space<vmem>>, vector<1x24x128xbf16>,
    } else {
    }
    %c1_i32 = arith.constant 1 : i32
    %30 = arith.cmpi eq, %arg1, %c1_i32 : i32
    %31 = arith.extui %30 : i1 to i32
    %c0_i32_26 = arith.constant 0 : i32
    %32 = arith.cmpi ne, %31, %c0_i32_26 : i32
    scf.if %32 {
      %cst_54 = arith.constant 0.000000e+00 : bf16
      %69 = vector.broadcast %cst_54 : bf16 to vector<1x24x128xbf16>
      %c5 = arith.constant 5 : index
      %c0_55 = arith.constant 0 : index
      %c0_56 = arith.constant 0 : index
      %70 = vector.load %arg9[%c5, %c0_55, %c0_56] : memref<6x24x128xbf16, #tpu.memory_space<vmem>>, vector<1x24x128xbf16>
      tpu.vector_store %arg9[%c5, %c0_55, %c0_56], %69 {strides = array<i32>} : memref<6x24x128xbf16, #tpu.memory_space<vmem>>, vector<1x24x128xbf16>,
    } else {
    }
    %33 = vector.extract_strided_slice %8 {offsets = [0, 128], sizes = [48, 128], strides = [1, 1]} : vector<48x256xf32> to vector<48x128xf32>
    %34 = vector.shape_cast %33 : vector<48x128xf32> to vector<6x8x128xf32>
    %35 = vector.extract_strided_slice %34 {offsets = [1, 0, 0], sizes = [4, 8, 128], strides = [1, 1, 1]} : vector<6x8x128xf32> to vector<4x8x128xf32>
    %36 = vector.shape_cast %35 : vector<4x8x128xf32> to vector<32x128xf32>
    %c0_27 = arith.constant 0 : index
    %c0_28 = arith.constant 0 : index
    %c0_29 = arith.constant 0 : index
    %37 = vector.load %arg9[%c0_27, %c0_28, %c0_29] : memref<6x24x128xbf16, #tpu.memory_space<vmem>>, vector<4x24x128xbf16>
    %c1_30 = arith.constant 1 : index
    %c0_31 = arith.constant 0 : index
    %c0_32 = arith.constant 0 : index
    %38 = vector.load %arg9[%c1_30, %c0_31, %c0_32] : memref<6x24x128xbf16, #tpu.memory_space<vmem>>, vector<4x24x128xbf16>
    %c2 = arith.constant 2 : index
    %c0_33 = arith.constant 0 : index
    %c0_34 = arith.constant 0 : index
    %39 = vector.load %arg9[%c2, %c0_33, %c0_34] : memref<6x24x128xbf16, #tpu.memory_space<vmem>>, vector<4x24x128xbf16>
    %40 = tpu.concatenate %37, %38, %39 in 2 : vector<4x24x128xbf16>, vector<4x24x128xbf16>, vector<4x24x128xbf16> -> vector<4x24x384xbf16>
    %41 = vector.extract_strided_slice %40 {offsets = [0, 7, 0], sizes = [4, 8, 384], strides = [1, 1, 1]} : vector<4x24x384xbf16> to vector<4x8x384xbf16>
    %42 = vector.shape_cast %41 : vector<4x8x384xbf16> to vector<32x384xbf16>
    %c0_35 = arith.constant 0 : index
    %c0_36 = arith.constant 0 : index
    %c0_37 = arith.constant 0 : index
    %43 = vector.load %arg6[%c0_35, %c0_36, %c0_37] : memref<3x384x128xbf16, #tpu.memory_space<vmem>>, vector<1x384x128xbf16>
    %44 = vector.shape_cast %43 : vector<1x384x128xbf16> to vector<384x128xbf16>
    %cst_38 = arith.constant dense<0.000000e+00> : vector<32x128xf32>
    %45 = tpu.matmul %42, %44, %cst_38 {dimension_numbers = #tpu.dot_dimension_numbers<[1], [0], [0], [1], [0, 0, 1, 1], [], []>} : vector<32x384xbf16>, vector<384x128xbf16>, vector<32x128xf32> -> vector<32x128xf32>
    %46 = arith.addf %36, %45 : vector<32x128xf32>
    %47 = vector.extract_strided_slice %40 {offsets = [0, 8, 0], sizes = [4, 8, 384], strides = [1, 1, 1]} : vector<4x24x384xbf16> to vector<4x8x384xbf16>
    %48 = vector.shape_cast %47 : vector<4x8x384xbf16> to vector<32x384xbf16>
    %c1_39 = arith.constant 1 : index
    %c0_40 = arith.constant 0 : index
    %c0_41 = arith.constant 0 : index
    %49 = vector.load %arg6[%c1_39, %c0_40, %c0_41] : memref<3x384x128xbf16, #tpu.memory_space<vmem>>, vector<1x384x128xbf16>
    %50 = vector.shape_cast %49 : vector<1x384x128xbf16> to vector<384x128xbf16>
    %cst_42 = arith.constant dense<0.000000e+00> : vector<32x128xf32>
    %51 = tpu.matmul %48, %50, %cst_42 {dimension_numbers = #tpu.dot_dimension_numbers<[1], [0], [0], [1], [0, 0, 1, 1], [], []>} : vector<32x384xbf16>, vector<384x128xbf16>, vector<32x128xf32> -> vector<32x128xf32>
    %52 = arith.addf %46, %51 : vector<32x128xf32>
    %53 = vector.extract_strided_slice %40 {offsets = [0, 9, 0], sizes = [4, 8, 384], strides = [1, 1, 1]} : vector<4x24x384xbf16> to vector<4x8x384xbf16>
    %54 = vector.shape_cast %53 : vector<4x8x384xbf16> to vector<32x384xbf16>
    %c2_43 = arith.constant 2 : index
    %c0_44 = arith.constant 0 : index
    %c0_45 = arith.constant 0 : index
    %55 = vector.load %arg6[%c2_43, %c0_44, %c0_45] : memref<3x384x128xbf16, #tpu.memory_space<vmem>>, vector<1x384x128xbf16>
    %56 = vector.shape_cast %55 : vector<1x384x128xbf16> to vector<384x128xbf16>
    %cst_46 = arith.constant dense<0.000000e+00> : vector<32x128xf32>
    %57 = tpu.matmul %54, %56, %cst_46 {dimension_numbers = #tpu.dot_dimension_numbers<[1], [0], [0], [1], [0, 0, 1, 1], [], []>} : vector<32x384xbf16>, vector<384x128xbf16>, vector<32x128xf32> -> vector<32x128xf32>
    %58 = arith.addf %52, %57 : vector<32x128xf32>
    %c0_47 = arith.constant 0 : index
    %c0_48 = arith.constant 0 : index
    %59 = vector.load %arg7[%c0_47, %c0_48] : memref<1x128xf32, #tpu.memory_space<vmem>>, vector<1x128xf32>
    %60 = vector.broadcast %59 : vector<1x128xf32> to vector<32x128xf32>
    %61 = arith.addf %58, %60 : vector<32x128xf32>
    %cst_49 = arith.constant 0.000000e+00 : f32
    %62 = vector.broadcast %cst_49 : f32 to vector<32x128xf32>
    %63 = arith.maximumf %61, %62 : vector<32x128xf32>
    %64 = vector.shape_cast %63 : vector<32x128xf32> to vector<4x8x128xf32>
    %65 = arith.truncf %64 : vector<4x8x128xf32> to vector<4x8x128xbf16>
    %c0_50 = arith.constant 0 : index
    %c0_51 = arith.constant 0 : index
    %c0_52 = arith.constant 0 : index
    %c0_53 = arith.constant 0 : index
    %66 = vector.load %arg8[%c0_50, %c0_51, %c0_52, %c0_53] : memref<1x4x8x128xbf16, #tpu.memory_space<vmem>>, vector<1x4x8x128xbf16>
    %67 = vector.shape_cast %66 : vector<1x4x8x128xbf16> to vector<4x8x128xbf16>
    %68 = vector.shape_cast %65 : vector<4x8x128xbf16> to vector<1x4x8x128xbf16>
    tpu.vector_store %arg8[%c0_50, %c0_51, %c0_52, %c0_53], %68 {strides = array<i32>} : memref<1x4x8x128xbf16, #tpu.memory_space<vmem>>, vector<1x4x8x128xbf16>,
    return
  }
  func.func @transform_0(%arg0: i32, %arg1: i32) -> (i32, i32, i32, i32, i32) {
    %c0_i32 = arith.constant 0 : i32
    %c0_i32_0 = arith.constant 0 : i32
    %c0_i32_1 = arith.constant 0 : i32
    %c0_i32_2 = arith.constant 0 : i32
    return %arg0, %arg1, %c0_i32, %c0_i32_0, %c0_i32_1 : i32, i32, i32, i32, i32
  }
  func.func @transform_1(%arg0: i32, %arg1: i32) -> (i32, i32) {
    %c0_i32 = arith.constant 0 : i32
    %c0_i32_0 = arith.constant 0 : i32
    %c0_i32_1 = arith.constant 0 : i32
    return %c0_i32, %c0_i32_0 : i32, i32
  }
  func.func @transform_2(%arg0: i32, %arg1: i32) -> (i32, i32) {
    %c0_i32 = arith.constant 0 : i32
    %c0_i32_0 = arith.constant 0 : i32
    %c0_i32_1 = arith.constant 0 : i32
    return %c0_i32, %c0_i32_0 : i32, i32
  }
  func.func @transform_3(%arg0: i32, %arg1: i32) -> (i32, i32) {
    %c0_i32 = arith.constant 0 : i32
    %c0_i32_0 = arith.constant 0 : i32
    %c0_i32_1 = arith.constant 0 : i32
    return %c0_i32, %c0_i32_0 : i32, i32
  }
  func.func @transform_4(%arg0: i32, %arg1: i32) -> (i32, i32, i32) {
    %c0_i32 = arith.constant 0 : i32
    %c0_i32_0 = arith.constant 0 : i32
    %c0_i32_1 = arith.constant 0 : i32
    %c0_i32_2 = arith.constant 0 : i32
    return %c0_i32, %c0_i32_0, %c0_i32_1 : i32, i32, i32
  }
  func.func @transform_5(%arg0: i32, %arg1: i32) -> (i32, i32) {
    %c0_i32 = arith.constant 0 : i32
    %c0_i32_0 = arith.constant 0 : i32
    %c0_i32_1 = arith.constant 0 : i32
    return %c0_i32, %c0_i32_0 : i32, i32
  }
  func.func @transform_6(%arg0: i32, %arg1: i32) -> (i32, i32, i32, i32) {
    %c0_i32 = arith.constant 0 : i32
    %c0_i32_0 = arith.constant 0 : i32
    %c0_i32_1 = arith.constant 0 : i32
    return %arg0, %arg1, %c0_i32, %c0_i32_0 : i32, i32, i32, i32
  }
}

</mosaic_0001>

<llo_original>
// kernel: forward.1
$region0: #{forward.1}
  #allocation0 [shape = 'u32[]', space=smem, size = 0x4, offset = 0x4, fixed_abs, tag = 'smem constant byte address 0x4 - core index']
  #allocation1 [shape = 'u32[144,128]{1,0:T(1,128)}', space=vmem, size = 0x12000, scoped, tag = 'internal scratch']
  #allocation2 [shape = 'bf16[6,24,128]{2,1,0:T(8,128)(2,1)}', space=vmem, size = 0x9000, scoped, tag = 'scratch operand']
  %s0 = inlined_call_operand.vmem [shape: bf16[2,2,7,16,128], index: 0, kind: input, shape index: {}]
  %s1 = inlined_call_operand.vmem [shape: bf16[256,256], index: 1, kind: input, shape index: {}]
  %s2 = inlined_call_operand.vmem [shape: bf16[256,128], index: 2, kind: input, shape index: {}]
  %s3 = inlined_call_operand.vmem [shape: f32[1,128], index: 3, kind: input, shape index: {}]
  %s4 = inlined_call_operand.vmem [shape: bf16[3,384,128], index: 4, kind: input, shape index: {}]
  %s5 = inlined_call_operand.vmem [shape: f32[1,128], index: 5, kind: input, shape index: {}]
  %s6 = inlined_call_operand.vmem [shape: bf16[2,8,8,128], index: 6, kind: output, shape index: {}]
  %s7 = sld [smem:[#allocation0]]
  $region65: #{forward.1} parent=0
    _
  %s9 = ssub.s32 1, %s7
  %s10 = scalar_select 0, %s9, %s7
  loop: start=0, step=1, limit=6
  $region2: #{forward.1} parent=0 // loop_pre_header
    _
  $region3: #{forward.1} parent=0 // loop_header
    %s12 = sphi 0, %s16
    %p13 = scmp.ge.s32.totalorder %s12, 6
    %s19 = sphi 0, %s31
    %s20 = sphi 0, %s27
    %s21 = sphi 0, %s19
    %s22 = sphi 0, %s20
    %s23 = sphi 0, %s21
    %s24 = sphi 0, %s22
    %s36 = sphi 0, %s38
    %s39 = sphi 0, %s36
    %s40 = sphi 0, %s39
    %s56 = sphi 0, %s40
    %s60 = sphi 0, %s60
    %s62 = sphi 0, %s60
    %s63 = sphi 0, %s62
    %s77 = sphi 0, %s63
    %s81 = sphi 0, %s81
    %s83 = sphi 0, %s81
    %s84 = sphi 0, %s83
    %s98 = sphi 0, %s84
    %s102 = sphi 0, %s102
    %s104 = sphi 0, %s102
    %s105 = sphi 0, %s104
    %s119 = sphi 0, %s105
    %s123 = sphi 0, %s123
    %s125 = sphi 0, %s123
    %s126 = sphi 0, %s125
    %s140 = sphi 0, %s126
    %s144 = sphi 0, %s144
    %s146 = sphi 0, %s144
    %s147 = sphi 0, %s146
    %s161 = sphi 0, %s147
    %s169 = sphi 0, %s171
    %s172 = sphi 0, %s169
    %s173 = sphi 0, %s172
    %s189 = sphi 0, %s173
  $region4: #{forward.1} parent=0 // loop_header_branch
    %15 = sbr.rel (%p13) target = $region8
  $region5: #{forward.1} parent=0 // loop_body
    %s17 = ssub.s32 %s12, 1
    %s18 = ssub.s32 %s12, 2
    %s25 = sadd.s32 1, %s20
    %p26 = scmp.ge.s32.totalorder %s25, 2
    %s27 = scalar_select %p26, 0, %s25
    %s28 = sadd.s32 1, %s19
    %s29 = scalar_select %p26, %s28, %s19
    %p30 = scmp.ge.s32.totalorder %s29, 2
    %s31 = scalar_select %p30, 0, %s29
    %s32 = ssub.s32 %s19, %s31
    %s33 = ssub.s32 %s20, %s27
    %s34 = sor.u32 %s32, %s33
    %p35 = scmp.eq.s32.totalorder %s34, 0
    %s37 = sadd.s32 %s36, 1
    %s38 = scalar_select %p35, %s36, %s37
    %p41 = pneg %p35
    %p42 = scmp.eq.s32.totalorder %s12, 3
    %p43 = por %p41, %p42
    %p44 = scmp.ne.s32.totalorder %s36, %s39
    %p45 = scmp.eq.s32.totalorder %s12, 0
    %p46 = por %p44, %p45
    %p47 = scmp.ne.s32.totalorder %s36, %s39
    %p48 = scmp.eq.s32.totalorder %s17, 3
    %p49 = por %p47, %p48
    %p50 = scmp.ne.s32.totalorder %s39, %s40
    %p51 = scmp.eq.s32.totalorder %s17, 0
    %p52 = por %p50, %p51
    %p53 = scmp.ne.s32.totalorder %s39, %s40
    %p54 = scmp.eq.s32.totalorder %s18, 3
    %p55 = por %p53, %p54
    %p57 = scmp.ne.s32.totalorder %s40, %s56
    %p58 = scmp.eq.s32.totalorder %s18, 0
    %p59 = por %p57, %p58
    %s61 = sadd.s32 %s60, 1
    %p64 = scmp.eq.s32.totalorder %s12, 3
    %p65 = scmp.ne.s32.totalorder %s60, %s62
    %p66 = scmp.eq.s32.totalorder %s12, 0
    %p67 = por %p65, %p66
    %p68 = scmp.ne.s32.totalorder %s60, %s62
    %p69 = scmp.eq.s32.totalorder %s17, 3
    %p70 = por %p68, %p69
    %p71 = scmp.ne.s32.totalorder %s62, %s63
    %p72 = scmp.eq.s32.totalorder %s17, 0
    %p73 = por %p71, %p72
    %p74 = scmp.ne.s32.totalorder %s62, %s63
    %p75 = scmp.eq.s32.totalorder %s18, 3
    %p76 = por %p74, %p75
    %p78 = scmp.ne.s32.totalorder %s63, %s77
    %p79 = scmp.eq.s32.totalorder %s18, 0
    %p80 = por %p78, %p79
    %s82 = sadd.s32 %s81, 1
    %p85 = scmp.eq.s32.totalorder %s12, 3
    %p86 = scmp.ne.s32.totalorder %s81, %s83
    %p87 = scmp.eq.s32.totalorder %s12, 0
    %p88 = por %p86, %p87
    %p89 = scmp.ne.s32.totalorder %s81, %s83
    %p90 = scmp.eq.s32.totalorder %s17, 3
    %p91 = por %p89, %p90
    %p92 = scmp.ne.s32.totalorder %s83, %s84
    %p93 = scmp.eq.s32.totalorder %s17, 0
    %p94 = por %p92, %p93
    %p95 = scmp.ne.s32.totalorder %s83, %s84
    %p96 = scmp.eq.s32.totalorder %s18, 3
    %p97 = por %p95, %p96
    %p99 = scmp.ne.s32.totalorder %s84, %s98
    %p100 = scmp.eq.s32.totalorder %s18, 0
    %p101 = por %p99, %p100
    %s103 = sadd.s32 %s102, 1
    %p106 = scmp.eq.s32.totalorder %s12, 3
    %p107 = scmp.ne.s32.totalorder %s102, %s104
    %p108 = scmp.eq.s32.totalorder %s12, 0
    %p109 = por %p107, %p108
    %p110 = scmp.ne.s32.totalorder %s102, %s104
    %p111 = scmp.eq.s32.totalorder %s17, 3
    %p112 = por %p110, %p111
    %p113 = scmp.ne.s32.totalorder %s104, %s105
    %p114 = scmp.eq.s32.totalorder %s17, 0
    %p115 = por %p113, %p114
    %p116 = scmp.ne.s32.totalorder %s104, %s105
    %p117 = scmp.eq.s32.totalorder %s18, 3
    %p118 = por %p116, %p117
    %p120 = scmp.ne.s32.totalorder %s105, %s119
    %p121 = scmp.eq.s32.totalorder %s18, 0
    %p122 = por %p120, %p121
    %s124 = sadd.s32 %s123, 1
    %p127 = scmp.eq.s32.totalorder %s12, 3
    %p128 = scmp.ne.s32.totalorder %s123, %s125
    %p129 = scmp.eq.s32.totalorder %s12, 0
    %p130 = por %p128, %p129
    %p131 = scmp.ne.s32.totalorder %s123, %s125
    %p132 = scmp.eq.s32.totalorder %s17, 3
    %p133 = por %p131, %p132
    %p134 = scmp.ne.s32.totalorder %s125, %s126
    %p135 = scmp.eq.s32.totalorder %s17, 0
    %p136 = por %p134, %p135
    %p137 = scmp.ne.s32.totalorder %s125, %s126
    %p138 = scmp.eq.s32.totalorder %s18, 3
    %p139 = por %p137, %p138
    %p141 = scmp.ne.s32.totalorder %s126, %s140
    %p142 = scmp.eq.s32.totalorder %s18, 0
    %p143 = por %p141, %p142
    %s145 = sadd.s32 %s144, 1
    %p148 = scmp.eq.s32.totalorder %s12, 3
    %p149 = scmp.ne.s32.totalorder %s144, %s146
    %p150 = scmp.eq.s32.totalorder %s12, 0
    %p151 = por %p149, %p150
    %p152 = scmp.ne.s32.totalorder %s144, %s146
    %p153 = scmp.eq.s32.totalorder %s17, 3
    %p154 = por %p152, %p153
    %p155 = scmp.ne.s32.totalorder %s146, %s147
    %p156 = scmp.eq.s32.totalorder %s17, 0
    %p157 = por %p155, %p156
    %p158 = scmp.ne.s32.totalorder %s146, %s147
    %p159 = scmp.eq.s32.totalorder %s18, 3
    %p160 = por %p158, %p159
    %p162 = scmp.ne.s32.totalorder %s147, %s161
    %p163 = scmp.eq.s32.totalorder %s18, 0
    %p164 = por %p162, %p163
    %s165 = ssub.s32 %s19, %s31
    %s166 = ssub.s32 %s20, %s27
    %s167 = sor.u32 %s165, %s166
    %p168 = scmp.eq.s32.totalorder %s167, 0
    %s170 = sadd.s32 %s169, 1
    %s171 = scalar_select %p168, %s169, %s170
    %p174 = pneg %p168
    %p175 = scmp.eq.s32.totalorder %s12, 3
    %p176 = por %p174, %p175
    %p177 = scmp.ne.s32.totalorder %s169, %s172
    %p178 = scmp.eq.s32.totalorder %s12, 0
    %p179 = por %p177, %p178
    %p180 = scmp.ne.s32.totalorder %s169, %s172
    %p181 = scmp.eq.s32.totalorder %s17, 3
    %p182 = por %p180, %p181
    %p183 = scmp.ne.s32.totalorder %s172, %s173
    %p184 = scmp.eq.s32.totalorder %s17, 0
    %p185 = por %p183, %p184
    %p186 = scmp.ne.s32.totalorder %s172, %s173
    %p187 = scmp.eq.s32.totalorder %s18, 3
    %p188 = por %p186, %p187
    %p190 = scmp.ne.s32.totalorder %s173, %s189
    %p191 = scmp.eq.s32.totalorder %s18, 0
    %p192 = por %p190, %p191
    %p193 = scmp.le.s32.totalorder 1, %s12
    %p194 = scmp.lt.s32.totalorder %s12, 5
    %p195 = pnand %p193, %p194
    %p196 = pneg %p195
    // Predicated region
    $region9: #{forward.1} parent=5 // pred_check
      _
    $region10: #{forward.1} parent=5 // pred_check_branch
      %198 = sbr.rel (%p195) target = $region12
    $region11: #{forward.1} parent=5 // pred_region
      %s199 = ssub.s32 %s12, 1
      // Predicated region
      $region13: #{forward.1} parent=11 // pred_check
        %p200 = pneg %p73
      $region14: #{forward.1} parent=11 // pred_check_branch
        %202 = sbr.rel (%p200) target = $region16
      $region15: #{forward.1} parent=11 // pred_region
        _
      $region16: #{forward.1} parent=11 // pred_fallthru
        _
      // Predicated region
      $region17: #{forward.1} parent=11 // pred_check
        %p203 = pneg %p94
      $region18: #{forward.1} parent=11 // pred_check_branch
        %205 = sbr.rel (%p203) target = $region20
      $region19: #{forward.1} parent=11 // pred_region
        _
      $region20: #{forward.1} parent=11 // pred_fallthru
        _
      // Predicated region
      $region21: #{forward.1} parent=11 // pred_check
        %p206 = pneg %p115
      $region22: #{forward.1} parent=11 // pred_check_branch
        %208 = sbr.rel (%p206) target = $region24
      $region23: #{forward.1} parent=11 // pred_region
        _
      $region24: #{forward.1} parent=11 // pred_fallthru
        _
      // Predicated region
      $region25: #{forward.1} parent=11 // pred_check
        %p209 = pneg %p136
      $region26: #{forward.1} parent=11 // pred_check_branch
        %211 = sbr.rel (%p209) target = $region28
      $region27: #{forward.1} parent=11 // pred_region
        _
      $region28: #{forward.1} parent=11 // pred_fallthru
        _
      // Predicated region
      $region29: #{forward.1} parent=11 // pred_check
        %p212 = pneg %p157
      $region30: #{forward.1} parent=11 // pred_check_branch
        %214 = sbr.rel (%p212) target = $region32
      $region31: #{forward.1} parent=11 // pred_region
        _
      $region32: #{forward.1} parent=11 // pred_fallthru
        _
    $region12: #{forward.1} parent=5 // pred_fallthru
      _
    %p215 = scmp.lt.s32.totalorder %s12, 4
    // Predicated region
    $region33: #{forward.1} parent=5 // pred_check
      %p216 = pneg %p215
    $region34: #{forward.1} parent=5 // pred_check_branch
      %218 = sbr.rel (%p216) target = $region36
    $region35: #{forward.1} parent=5 // pred_region
      // Predicated region
      $region37: #{forward.1} parent=35 // pred_check
        %p219 = pneg %p46
      $region38: #{forward.1} parent=35 // pred_check_branch
        %221 = sbr.rel (%p219) target = $region40
      $region39: #{forward.1} parent=35 // pred_region
        %p222 = scmp.lt.s32.totalorder %s19, 1
        %s223 = scalar_select %p222, %s19, 1
        %p224 = scmp.lt.s32.totalorder %s20, 1
        %s225 = scalar_select %p224, %s20, 1
        %s226 = smul.addr %s225, 14
        %s227 = smul.addr %s223, 28
        %s228 = sadd.s32 %s226, %s227
        %s229 = smul.addr %s228, 4
        %s230 = scalar_lea.vmem %s0, %s229
      $region40: #{forward.1} parent=35 // pred_fallthru
        _
    $region36: #{forward.1} parent=5 // pred_fallthru
      _
    %p231 = scmp.le.s32.totalorder 1, %s12
    %p232 = scmp.lt.s32.totalorder %s12, 5
    %p233 = pnand %p231, %p232
    %p234 = pneg %p233
    // Predicated region
    $region41: #{forward.1} parent=5 // pred_check
      _
    $region42: #{forward.1} parent=5 // pred_check_branch
      %236 = sbr.rel (%p233) target = $region44
    $region43: #{forward.1} parent=5 // pred_region
      %s237 = ssub.s32 %s12, 1
      %p238 = scmp.lt.s32.totalorder %s21, 1
      %s239 = scalar_select %p238, %s21, 1
      %p240 = scmp.lt.s32.totalorder %s22, 1
      %s241 = scalar_select %p240, %s22, 1
      %s242 = smul.addr %s241, 14
      %s243 = smul.addr %s239, 28
      %s244 = sadd.s32 %s242, %s243
      %s245 = smul.addr %s244, 4
      %s246 = scalar_lea.vmem %s0, %s245
      %p247 = pneg %p52
      %p248 = pneg %p49
      %p249 = pneg %p73
      %p250 = pneg %p70
      %p251 = pneg %p94
      %p252 = pneg %p91
      %p253 = pneg %p115
      %p254 = pneg %p112
      %p255 = pneg %p136
      %p256 = pneg %p133
      %p257 = pneg %p157
      %p258 = pneg %p154
      %p259 = pneg %p185
      %p260 = pneg %p182
      %s261 = smul.u32 4, %s22
      %p262 = scmp.lt.s32.totalorder %s21, 1
      %s263 = scalar_select %p262, %s21, 1
      %p264 = scmp.lt.s32.totalorder %s261, 7
      %s265 = scalar_select %p264, %s261, 7
      %s266 = smul.addr %s263, 8
      %s267 = sadd.s32 %s265, %s266
      %s268 = smul.addr %s267, 4
      %s269 = scalar_lea.vmem %s6, %s268
      %p270 = scmp.lt.s32.totalorder %s21, 1
      %s271 = scalar_select %p270, %s21, 1
      %p272 = scmp.lt.s32.totalorder %s22, 1
      %s273 = scalar_select %p272, %s22, 1
      %s274 = smul.addr %s273, 14
      %s275 = smul.addr %s271, 28
      %s276 = sadd.s32 %s274, %s275
      %s277 = smul.addr %s276, 4
      %s278 = scalar_lea.vmem %s0, %s277
      %s279 = smul.u32 4, %s22
      %p280 = scmp.lt.s32.totalorder %s21, 1
      %s281 = scalar_select %p280, %s21, 1
      %p282 = scmp.lt.s32.totalorder %s279, 7
      %s283 = scalar_select %p282, %s279, 7
      %s284 = smul.addr %s281, 8
      %s285 = sadd.s32 %s283, %s284
      %s286 = smul.addr %s285, 4
      %s287 = scalar_lea.vmem %s6, %s286
      %s288 = smul.u32 4, %s22
      %v290 = vld [vmem:[%s278] sm:$0xf]
      %v291 = vld [vmem:[%s278 + $0x4] sm:$0xf]
      %v292 = vld [vmem:[%s278 + $0x8] sm:$0xf]
      %v293 = vld [vmem:[%s278 + $0xc] sm:$0xf]
      %v294 = vld [vmem:[%s278 + $0x10] sm:$0xf]
      %v295 = vld [vmem:[%s278 + $0x14] sm:$0xf]
      %v296 = vld [vmem:[%s278 + $0x18] sm:$0xf]
      %v297 = vld [vmem:[%s278 + $0x1c] sm:$0xf]
      %v298 = vld [vmem:[%s278 + $0x20] sm:$0xf]
      %v299 = vld [vmem:[%s278 + $0x24] sm:$0xf]
      %v300 = vld [vmem:[%s278 + $0x28] sm:$0xf]
      %v301 = vld [vmem:[%s278 + $0x2c] sm:$0xf]
      %s302 = scalar_lea.vmem %s278, 8
      %v303 = vld [vmem:[%s302] sm:$0xf]
      %v304 = vld [vmem:[%s302 + $0x4] sm:$0xf]
      %v305 = vld [vmem:[%s302 + $0x8] sm:$0xf]
      %v306 = vld [vmem:[%s302 + $0xc] sm:$0xf]
      %v307 = vld [vmem:[%s302 + $0x10] sm:$0xf]
      %v308 = vld [vmem:[%s302 + $0x14] sm:$0xf]
      %v309 = vld [vmem:[%s302 + $0x18] sm:$0xf]
      %v310 = vld [vmem:[%s302 + $0x1c] sm:$0xf]
      %v311 = vld [vmem:[%s302 + $0x20] sm:$0xf]
      %v312 = vld [vmem:[%s302 + $0x24] sm:$0xf]
      %v313 = vld [vmem:[%s302 + $0x28] sm:$0xf]
      %v314 = vld [vmem:[%s302 + $0x2c] sm:$0xf]
      %v327 = vunpack.c.l.b16 %v290
      %v328 = vunpack.c.l.b16 %v291
      %v329 = vunpack.c.l.b16 %v292
      %v330 = vunpack.c.l.b16 %v293
      %v331 = vunpack.c.l.b16 %v294
      %v332 = vunpack.c.l.b16 %v295
      %v333 = vunpack.c.l.b16 %v296
      %v334 = vunpack.c.l.b16 %v297
      %v335 = vunpack.c.l.b16 %v298
      %v336 = vunpack.c.l.b16 %v299
      %v337 = vunpack.c.l.b16 %v300
      %v338 = vunpack.c.l.b16 %v301
      %v351 = vunpack.c.l.b16 %v303
      %v352 = vunpack.c.l.b16 %v304
      %v353 = vunpack.c.l.b16 %v305
      %v354 = vunpack.c.l.b16 %v306
      %v355 = vunpack.c.l.b16 %v307
      %v356 = vunpack.c.l.b16 %v308
      %v357 = vunpack.c.l.b16 %v309
      %v358 = vunpack.c.l.b16 %v310
      %v359 = vunpack.c.l.b16 %v311
      %v360 = vunpack.c.l.b16 %v312
      %v361 = vunpack.c.l.b16 %v313
      %v362 = vunpack.c.l.b16 %v314
      %v363 = vld [vmem:[%s1] sm:$0xff]
      %v364 = vld [vmem:[%s1 + $0x8] sm:$0xff]
      %v365 = vld [vmem:[%s1 + $0x10] sm:$0xff]
      %v366 = vld [vmem:[%s1 + $0x18] sm:$0xff]
      %v367 = vld [vmem:[%s1 + $0x20] sm:$0xff]
      %v368 = vld [vmem:[%s1 + $0x28] sm:$0xff]
      %v369 = vld [vmem:[%s1 + $0x30] sm:$0xff]
      %v370 = vld [vmem:[%s1 + $0x38] sm:$0xff]
      %v371 = vld [vmem:[%s1 + $0x40] sm:$0xff]
      %v372 = vld [vmem:[%s1 + $0x48] sm:$0xff]
      %v373 = vld [vmem:[%s1 + $0x50] sm:$0xff]
      %v374 = vld [vmem:[%s1 + $0x58] sm:$0xff]
      %v375 = vld [vmem:[%s1 + $0x60] sm:$0xff]
      %v376 = vld [vmem:[%s1 + $0x68] sm:$0xff]
      %v377 = vld [vmem:[%s1 + $0x70] sm:$0xff]
      %v378 = vld [vmem:[%s1 + $0x78] sm:$0xff]
      %v379 = vld [vmem:[%s1 + $0x80] sm:$0xff]
      %v380 = vld [vmem:[%s1 + $0x88] sm:$0xff]
      %v381 = vld [vmem:[%s1 + $0x90] sm:$0xff]
      %v382 = vld [vmem:[%s1 + $0x98] sm:$0xff]
      %v383 = vld [vmem:[%s1 + $0xa0] sm:$0xff]
      %v384 = vld [vmem:[%s1 + $0xa8] sm:$0xff]
      %v385 = vld [vmem:[%s1 + $0xb0] sm:$0xff]
      %v386 = vld [vmem:[%s1 + $0xb8] sm:$0xff]
      %v387 = vld [vmem:[%s1 + $0xc0] sm:$0xff]
      %v388 = vld [vmem:[%s1 + $0xc8] sm:$0xff]
      %v389 = vld [vmem:[%s1 + $0xd0] sm:$0xff]
      %v390 = vld [vmem:[%s1 + $0xd8] sm:$0xff]
      %v391 = vld [vmem:[%s1 + $0xe0] sm:$0xff]
      %v392 = vld [vmem:[%s1 + $0xe8] sm:$0xff]
      %v393 = vld [vmem:[%s1 + $0xf0] sm:$0xff]
      %v394 = vld [vmem:[%s1 + $0xf8] sm:$0xff]
      %v395 = vpack.c.b16 %v329, %v327
      %v396 = vpack.c.b16 %v353, %v351
      %v397 = vpack.c.b16 %v333, %v331
      %v398 = vpack.c.b16 %v357, %v355
      %v399 = vpack.c.b16 %v337, %v335
      %v400 = vpack.c.b16 %v361, %v359
      %v439 = vunpack.c.l.b16 %v363
      %v440 = vunpack.c.h.b16 %v363
      %v441 = vunpack.c.l.b16 %v364
      %v442 = vunpack.c.h.b16 %v364
      %v443 = vunpack.c.l.b16 %v365
      %v444 = vunpack.c.h.b16 %v365
      %v445 = vunpack.c.l.b16 %v366
      %v446 = vunpack.c.h.b16 %v366
      %v447 = vunpack.c.l.b16 %v367
      %v448 = vunpack.c.h.b16 %v367
      %v449 = vunpack.c.l.b16 %v368
      %v450 = vunpack.c.h.b16 %v368
      %v451 = vunpack.c.l.b16 %v369
      %v452 = vunpack.c.h.b16 %v369
      %v453 = vunpack.c.l.b16 %v370
      %v454 = vunpack.c.h.b16 %v370
      %v455 = vunpack.c.l.b16 %v371
      %v456 = vunpack.c.h.b16 %v371
      %v457 = vunpack.c.l.b16 %v372
      %v458 = vunpack.c.h.b16 %v372
      %v459 = vunpack.c.l.b16 %v373
      %v460 = vunpack.c.h.b16 %v373
      %v461 = vunpack.c.l.b16 %v374
      %v462 = vunpack.c.h.b16 %v374
      %v463 = vunpack.c.l.b16 %v375
      %v464 = vunpack.c.h.b16 %v375
      %v465 = vunpack.c.l.b16 %v376
      %v466 = vunpack.c.h.b16 %v376
      %v467 = vunpack.c.l.b16 %v377
      %v468 = vunpack.c.h.b16 %v377
      %v469 = vunpack.c.l.b16 %v378
      %v470 = vunpack.c.h.b16 %v378
      %v471 = vunpack.c.l.b16 %v379
      %v472 = vunpack.c.h.b16 %v379
      %v473 = vunpack.c.l.b16 %v380
      %v474 = vunpack.c.h.b16 %v380
      %v475 = vunpack.c.l.b16 %v381
      %v476 = vunpack.c.h.b16 %v381
      %v477 = vunpack.c.l.b16 %v382
      %v478 = vunpack.c.h.b16 %v382
      %v479 = vunpack.c.l.b16 %v383
      %v480 = vunpack.c.h.b16 %v383
      %v481 = vunpack.c.l.b16 %v384
      %v482 = vunpack.c.h.b16 %v384
      %v483 = vunpack.c.l.b16 %v385
      %v484 = vunpack.c.h.b16 %v385
      %v485 = vunpack.c.l.b16 %v386
      %v486 = vunpack.c.h.b16 %v386
      %v487 = vunpack.c.l.b16 %v387
      %v488 = vunpack.c.h.b16 %v387
      %v489 = vunpack.c.l.b16 %v388
      %v490 = vunpack.c.h.b16 %v388
      %v491 = vunpack.c.l.b16 %v389
      %v492 = vunpack.c.h.b16 %v389
      %v493 = vunpack.c.l.b16 %v390
      %v494 = vunpack.c.h.b16 %v390
      %v495 = vunpack.c.l.b16 %v391
      %v496 = vunpack.c.h.b16 %v391
      %v497 = vunpack.c.l.b16 %v392
      %v498 = vunpack.c.h.b16 %v392
      %v499 = vunpack.c.l.b16 %v393
      %v500 = vunpack.c.h.b16 %v393
      %v501 = vunpack.c.l.b16 %v394
      %v502 = vunpack.c.h.b16 %v394
      %v503 = vpack.c.b16 %v441, %v439
      %v504 = vpack.c.b16 %v442, %v440
      %v505 = vpack.c.b16 %v445, %v443
      %v506 = vpack.c.b16 %v446, %v444
      %v507 = vpack.c.b16 %v449, %v447
      %v508 = vpack.c.b16 %v450, %v448
      %v509 = vpack.c.b16 %v453, %v451
      %v510 = vpack.c.b16 %v454, %v452
      %v511 = vpack.c.b16 %v457, %v455
      %v512 = vpack.c.b16 %v458, %v456
      %v513 = vpack.c.b16 %v461, %v459
      %v514 = vpack.c.b16 %v462, %v460
      %v515 = vpack.c.b16 %v465, %v463
      %v516 = vpack.c.b16 %v466, %v464
      %v517 = vpack.c.b16 %v469, %v467
      %v518 = vpack.c.b16 %v470, %v468
      %v519 = vpack.c.b16 %v473, %v471
      %v520 = vpack.c.b16 %v474, %v472
      %v521 = vpack.c.b16 %v477, %v475
      %v522 = vpack.c.b16 %v478, %v476
      %v523 = vpack.c.b16 %v481, %v479
      %v524 = vpack.c.b16 %v482, %v480
      %v525 = vpack.c.b16 %v485, %v483
      %v526 = vpack.c.b16 %v486, %v484
      %v527 = vpack.c.b16 %v489, %v487
      %v528 = vpack.c.b16 %v490, %v488
      %v529 = vpack.c.b16 %v493, %v491
      %v530 = vpack.c.b16 %v494, %v492
      %v531 = vpack.c.b16 %v497, %v495
      %v532 = vpack.c.b16 %v498, %v496
      %v533 = vpack.c.b16 %v501, %v499
      %v534 = vpack.c.b16 %v502, %v500
      %567 = vmatprep.subr.bf16.mxu0 %v518
      %568 = vmatpush1.bf16.msra.mxu0 %v517
      %569 = vmatprep.subr.bf16.mxu0 %v516
      %570 = vmatpush1.bf16.msra.mxu0 %v515
      %571 = vmatprep.subr.bf16.mxu0 %v514
      %572 = vmatpush1.bf16.msra.mxu0 %v513
      %573 = vmatprep.subr.bf16.mxu0 %v512
      %574 = vmatpush1.bf16.msra.mxu0 %v511
      %575 = vmatprep.subr.bf16.mxu0 %v510
      %576 = vmatpush1.bf16.msra.mxu0 %v509
      %577 = vmatprep.subr.bf16.mxu0 %v508
      %578 = vmatpush1.bf16.msra.mxu0 %v507
      %579 = vmatprep.subr.bf16.mxu0 %v506
      %580 = vmatpush1.bf16.msra.mxu0 %v505
      %581 = vmatprep.subr.bf16.mxu0 %v504
      %582 = vmatpush1.bf16.msra.mxu0 %v503
      %583 = vmatprep.subr.bf16.mxu0 %v534
      %584 = vmatpush2.bf16.msra.mxu0 %v533
      %585 = vmatprep.subr.bf16.mxu0 %v532
      %586 = vmatpush2.bf16.msra.mxu0 %v531
      %587 = vmatprep.subr.bf16.mxu0 %v530
      %588 = vmatpush2.bf16.msra.mxu0 %v529
      %589 = vmatprep.subr.bf16.mxu0 %v528
      %590 = vmatpush2.bf16.msra.mxu0 %v527
      %591 = vmatprep.subr.bf16.mxu0 %v526
      %592 = vmatpush2.bf16.msra.mxu0 %v525
      %593 = vmatprep.subr.bf16.mxu0 %v524
      %594 = vmatpush2.bf16.msra.mxu0 %v523
      %595 = vmatprep.subr.bf16.mxu0 %v522
      %596 = vmatpush2.bf16.msra.mxu0 %v521
      %597 = vmatprep.subr.bf16.mxu0 %v520
      %598 = vmatpush2.bf16.msra.mxu0 %v519
      %599 = vmatprep.mubr.bf16.mxu0 %v396
      %600 = vmatmul.mubr.bf16.gmra.mxu0 %v395
      %v601 = vpop.f32.mrf.mxu0
      %v602 = vadd.f32 0.0, %v601
      %v603 = vpop.f32.mrf.mxu0
      %v604 = vpop.f32.mrf.mxu0
      %v605 = vadd.f32 0.0, %v604
      %v606 = vpop.f32.mrf.mxu0
      %v607 = vadd.f32 0.0, %v606
      %608 = vmatprep.mubr.bf16.mxu0 %v398
      %609 = vmatmul.mubr.bf16.gmra.mxu0 %v397
      %v610 = vpop.f32.mrf.mxu0
      %v611 = vadd.f32 0.0, %v610
      %v612 = vpop.f32.mrf.mxu0
      %v613 = vadd.f32 0.0, %v612
      %v614 = vpop.f32.mrf.mxu0
      %v615 = vadd.f32 0.0, %v614
      %v616 = vpop.f32.mrf.mxu0
      %v617 = vadd.f32 0.0, %v616
      %618 = vmatprep.mubr.bf16.mxu0 %v400
      %619 = vmatmul.mubr.bf16.gmra.mxu0 %v399
      %v620 = vpop.f32.mrf.mxu0
      %v621 = vadd.f32 0.0, %v620
      %v622 = vpop.f32.mrf.mxu0
      %v623 = vadd.f32 0.0, %v622
      %v624 = vpop.f32.mrf.mxu0
      %v625 = vadd.f32 0.0, %v624
      %v626 = vpop.f32.mrf.mxu0
      %627 = vdwg.mxu0
      %v628 = vpack.c.b16 %v351, %v327
      %v629 = vpack.c.b16 %v352, %v328
      %v630 = vpack.c.b16 %v353, %v329
      %v631 = vpack.c.b16 %v354, %v330
      %v632 = vpack.c.b16 %v355, %v331
      %v633 = vpack.c.b16 %v356, %v332
      %v634 = vpack.c.b16 %v357, %v333
      %v635 = vpack.c.b16 %v358, %v334
      %v636 = vpack.c.b16 %v359, %v335
      %v637 = vpack.c.b16 %v360, %v336
      %v638 = vpack.c.b16 %v361, %v337
      %v639 = vpack.c.b16 %v362, %v338
      %vm640 = vsmask.f32 3328
      %vm641 = vsmask.f32 7440
      %vm642 = vmor %vm640, %vm641
      %v644 = vshrl.u32 %v628, 16
      %v646 = vrot.slane %v644, 4
      %v647 = vshll.u32 %v628, 16
      %v649 = vrot.slane %v647, 5
      %v650 = vor.u32 %v646, %v649
      %v651 = vrot.slane %v650, 4
      %v653 = vshll.u32 %v629, 16
      %v655 = vrot.slane %v653, 5
      %v656 = vsel %vm642, %v651, %v655
      %v658 = vshrl.u32 %v630, 16
      %v660 = vrot.slane %v658, 4
      %v661 = vshll.u32 %v630, 16
      %v663 = vrot.slane %v661, 5
      %v664 = vor.u32 %v660, %v663
      %v665 = vrot.slane %v664, 4
      %v667 = vshll.u32 %v631, 16
      %v669 = vrot.slane %v667, 5
      %v670 = vsel %vm642, %v665, %v669
      %v672 = vshrl.u32 %v632, 16
      %v674 = vrot.slane %v672, 4
      %v675 = vshll.u32 %v632, 16
      %v677 = vrot.slane %v675, 5
      %v678 = vor.u32 %v674, %v677
      %v679 = vrot.slane %v678, 4
      %v681 = vshll.u32 %v633, 16
      %v683 = vrot.slane %v681, 5
      %v684 = vsel %vm642, %v679, %v683
      %v686 = vshrl.u32 %v634, 16
      %v688 = vrot.slane %v686, 4
      %v689 = vshll.u32 %v634, 16
      %v691 = vrot.slane %v689, 5
      %v692 = vor.u32 %v688, %v691
      %v693 = vrot.slane %v692, 4
      %v695 = vshll.u32 %v635, 16
      %v697 = vrot.slane %v695, 5
      %v698 = vsel %vm642, %v693, %v697
      %v700 = vshrl.u32 %v636, 16
      %v702 = vrot.slane %v700, 4
      %v703 = vshll.u32 %v636, 16
      %v705 = vrot.slane %v703, 5
      %v706 = vor.u32 %v702, %v705
      %v707 = vrot.slane %v706, 4
      %v709 = vshll.u32 %v637, 16
      %v711 = vrot.slane %v709, 5
      %v712 = vsel %vm642, %v707, %v711
      %v714 = vshrl.u32 %v638, 16
      %v716 = vrot.slane %v714, 4
      %v717 = vshll.u32 %v638, 16
      %v719 = vrot.slane %v717, 5
      %v720 = vor.u32 %v716, %v719
      %v721 = vrot.slane %v720, 4
      %v723 = vshll.u32 %v639, 16
      %v725 = vrot.slane %v723, 5
      %v726 = vsel %vm642, %v721, %v725
      %v727 = vld [vmem:[%s2] sm:$0xf]
      %v728 = vld [vmem:[%s2 + $0x4] sm:$0xf]
      %v729 = vld [vmem:[%s2 + $0x8] sm:$0xf]
      %v730 = vld [vmem:[%s2 + $0xc] sm:$0xf]
      %v731 = vld [vmem:[%s2 + $0x10] sm:$0xf]
      %v732 = vld [vmem:[%s2 + $0x14] sm:$0xf]
      %v733 = vld [vmem:[%s2 + $0x18] sm:$0xf]
      %v734 = vld [vmem:[%s2 + $0x1c] sm:$0xf]
      %v735 = vld [vmem:[%s2 + $0x20] sm:$0xf]
      %v736 = vld [vmem:[%s2 + $0x24] sm:$0xf]
      %v737 = vld [vmem:[%s2 + $0x28] sm:$0xf]
      %v738 = vld [vmem:[%s2 + $0x2c] sm:$0xf]
      %v739 = vld [vmem:[%s2 + $0x30] sm:$0xf]
      %v740 = vld [vmem:[%s2 + $0x34] sm:$0xf]
      %v741 = vld [vmem:[%s2 + $0x38] sm:$0xf]
      %v742 = vld [vmem:[%s2 + $0x3c] sm:$0xf]
      %v743 = vld [vmem:[%s2 + $0x40] sm:$0xf]
      %v744 = vld [vmem:[%s2 + $0x44] sm:$0xf]
      %v745 = vld [vmem:[%s2 + $0x48] sm:$0xf]
      %v746 = vld [vmem:[%s2 + $0x4c] sm:$0xf]
      %v747 = vld [vmem:[%s2 + $0x50] sm:$0xf]
      %v748 = vld [vmem:[%s2 + $0x54] sm:$0xf]
      %v749 = vld [vmem:[%s2 + $0x58] sm:$0xf]
      %v750 = vld [vmem:[%s2 + $0x5c] sm:$0xf]
      %v751 = vld [vmem:[%s2 + $0x60] sm:$0xf]
      %v752 = vld [vmem:[%s2 + $0x64] sm:$0xf]
      %v753 = vld [vmem:[%s2 + $0x68] sm:$0xf]
      %v754 = vld [vmem:[%s2 + $0x6c] sm:$0xf]
      %v755 = vld [vmem:[%s2 + $0x70] sm:$0xf]
      %v756 = vld [vmem:[%s2 + $0x74] sm:$0xf]
      %v757 = vld [vmem:[%s2 + $0x78] sm:$0xf]
      %v758 = vld [vmem:[%s2 + $0x7c] sm:$0xf]
      %v759 = vunpack.c.l.b16 %v656
      %v760 = vunpack.c.h.b16 %v656
      %v761 = vunpack.c.l.b16 %v670
      %v762 = vunpack.c.h.b16 %v670
      %v763 = vunpack.c.l.b16 %v684
      %v764 = vunpack.c.h.b16 %v684
      %v765 = vunpack.c.l.b16 %v698
      %v766 = vunpack.c.h.b16 %v698
      %v767 = vunpack.c.l.b16 %v712
      %v768 = vunpack.c.h.b16 %v712
      %v769 = vunpack.c.l.b16 %v726
      %v770 = vunpack.c.h.b16 %v726
      %v771 = vpack.c.b16 %v761, %v759
      %v772 = vpack.c.b16 %v762, %v760
      %v773 = vpack.c.b16 %v765, %v763
      %v774 = vpack.c.b16 %v766, %v764
      %v775 = vpack.c.b16 %v769, %v767
      %v776 = vpack.c.b16 %v770, %v768
      %v815 = vunpack.c.l.b16 %v727
      %v816 = vunpack.c.l.b16 %v728
      %v817 = vunpack.c.l.b16 %v729
      %v818 = vunpack.c.l.b16 %v730
      %v819 = vunpack.c.l.b16 %v731
      %v820 = vunpack.c.l.b16 %v732
      %v821 = vunpack.c.l.b16 %v733
      %v822 = vunpack.c.l.b16 %v734
      %v823 = vunpack.c.l.b16 %v735
      %v824 = vunpack.c.l.b16 %v736
      %v825 = vunpack.c.l.b16 %v737
      %v826 = vunpack.c.l.b16 %v738
      %v827 = vunpack.c.l.b16 %v739
      %v828 = vunpack.c.l.b16 %v740
      %v829 = vunpack.c.l.b16 %v741
      %v830 = vunpack.c.l.b16 %v742
      %v831 = vunpack.c.l.b16 %v743
      %v832 = vunpack.c.l.b16 %v744
      %v833 = vunpack.c.l.b16 %v745
      %v834 = vunpack.c.l.b16 %v746
      %v835 = vunpack.c.l.b16 %v747
      %v836 = vunpack.c.l.b16 %v748
      %v837 = vunpack.c.l.b16 %v749
      %v838 = vunpack.c.l.b16 %v750
      %v839 = vunpack.c.l.b16 %v751
      %v840 = vunpack.c.l.b16 %v752
      %v841 = vunpack.c.l.b16 %v753
      %v842 = vunpack.c.l.b16 %v754
      %v843 = vunpack.c.l.b16 %v755
      %v844 = vunpack.c.l.b16 %v756
      %v845 = vunpack.c.l.b16 %v757
      %v846 = vunpack.c.l.b16 %v758
      %v847 = vpack.c.b16 %v816, %v815
      %v848 = vpack.c.b16 %v818, %v817
      %v849 = vpack.c.b16 %v820, %v819
      %v850 = vpack.c.b16 %v822, %v821
      %v851 = vpack.c.b16 %v824, %v823
      %v852 = vpack.c.b16 %v826, %v825
      %v853 = vpack.c.b16 %v828, %v827
      %v854 = vpack.c.b16 %v830, %v829
      %v855 = vpack.c.b16 %v832, %v831
      %v856 = vpack.c.b16 %v834, %v833
      %v857 = vpack.c.b16 %v836, %v835
      %v858 = vpack.c.b16 %v838, %v837
      %v859 = vpack.c.b16 %v840, %v839
      %v860 = vpack.c.b16 %v842, %v841
      %v861 = vpack.c.b16 %v844, %v843
      %v862 = vpack.c.b16 %v846, %v845
      %879 = vmatprep.subr.bf16.mxu0 0
      %880 = vmatpush1.bf16.msra.mxu0 %v854
      %881 = vmatprep.subr.bf16.mxu0 0
      %882 = vmatpush1.bf16.msra.mxu0 %v853
      %883 = vmatprep.subr.bf16.mxu0 0
      %884 = vmatpush1.bf16.msra.mxu0 %v852
      %885 = vmatprep.subr.bf16.mxu0 0
      %886 = vmatpush1.bf16.msra.mxu0 %v851
      %887 = vmatprep.subr.bf16.mxu0 0
      %888 = vmatpush1.bf16.msra.mxu0 %v850
      %889 = vmatprep.subr.bf16.mxu0 0
      %890 = vmatpush1.bf16.msra.mxu0 %v849
      %891 = vmatprep.subr.bf16.mxu0 0
      %892 = vmatpush1.bf16.msra.mxu0 %v848
      %893 = vmatprep.subr.bf16.mxu0 0
      %894 = vmatpush1.bf16.msra.mxu0 %v847
      %895 = vmatprep.subr.bf16.mxu0 0
      %896 = vmatpush2.bf16.msra.mxu0 %v862
      %897 = vmatprep.subr.bf16.mxu0 0
      %898 = vmatpush2.bf16.msra.mxu0 %v861
      %899 = vmatprep.subr.bf16.mxu0 0
      %900 = vmatpush2.bf16.msra.mxu0 %v860
      %901 = vmatprep.subr.bf16.mxu0 0
      %902 = vmatpush2.bf16.msra.mxu0 %v859
      %903 = vmatprep.subr.bf16.mxu0 0
      %904 = vmatpush2.bf16.msra.mxu0 %v858
      %905 = vmatprep.subr.bf16.mxu0 0
      %906 = vmatpush2.bf16.msra.mxu0 %v857
      %907 = vmatprep.subr.bf16.mxu0 0
      %908 = vmatpush2.bf16.msra.mxu0 %v856
      %909 = vmatprep.subr.bf16.mxu0 0
      %910 = vmatpush2.bf16.msra.mxu0 %v855
      %911 = vmatprep.mubr.bf16.mxu0 %v772
      %912 = vmatmul.mubr.bf16.gmra.mxu0 %v771
      %v913 = vpop.f32.mrf.mxu0
      %v914 = vadd.f32 0.0, %v913
      %v915 = vpop.f32.mrf.mxu0
      %v916 = vpop.f32.mrf.mxu0
      %v917 = vadd.f32 0.0, %v916
      %v918 = vpop.f32.mrf.mxu0
      %919 = vmatprep.mubr.bf16.mxu0 %v774
      %920 = vmatmul.mubr.bf16.gmra.mxu0 %v773
      %v921 = vpop.f32.mrf.mxu0
      %v922 = vadd.f32 0.0, %v921
      %v923 = vpop.f32.mrf.mxu0
      %v924 = vpop.f32.mrf.mxu0
      %v925 = vadd.f32 0.0, %v924
      %v926 = vpop.f32.mrf.mxu0
      %927 = vmatprep.mubr.bf16.mxu0 %v776
      %928 = vmatmul.mubr.bf16.gmra.mxu0 %v775
      %v929 = vpop.f32.mrf.mxu0
      %v930 = vadd.f32 0.0, %v929
      %v931 = vpop.f32.mrf.mxu0
      %v932 = vpop.f32.mrf.mxu0
      %v933 = vadd.f32 0.0, %v932
      %v934 = vpop.f32.mrf.mxu0
      %935 = vdwg.mxu0
      %v936 = vadd.f32 %v602, %v914
      %v937 = vadd.f32 %v605, %v917
      %v938 = vadd.f32 %v611, %v922
      %v939 = vadd.f32 %v615, %v925
      %v940 = vadd.f32 %v621, %v930
      %v941 = vadd.f32 %v625, %v933
      %v942 = vld [vmem:[%s3] sm:$0x1]
      %v944 = vlaneseq
      %v945 = vshrl.u32 %v944, 7
      %v946 = vsub.s32 0, %v945
      %v947 = vrot.slane %v942, %v946
      %v949 = vadd.f32 %v936, %v947
      %v950 = vadd.f32 %v937, %v947
      %v951 = vadd.f32 %v938, %v947
      %v952 = vadd.f32 %v939, %v947
      %v953 = vadd.f32 %v940, %v947
      %v954 = vadd.f32 %v941, %v947
      %v955 = vmax.f32 %v949, 0.0
      %v956 = vmax.f32 %v950, 0.0
      %v957 = vmax.f32 %v951, 0.0
      %v958 = vmax.f32 %v952, 0.0
      %v959 = vmax.f32 %v953, 0.0
      %v960 = vmax.f32 %v954, 0.0
      %v961 = vpack.c.bf16 %v955, %v955
      %v962 = vpack.c.bf16 %v956, %v956
      %v963 = vpack.c.bf16 %v957, %v957
      %v964 = vpack.c.bf16 %v958, %v958
      %v965 = vpack.c.bf16 %v959, %v959
      %v966 = vpack.c.bf16 %v960, %v960
      %967 = vst [vmem:[#allocation2] sm:$0xf] 0
      %968 = vst [vmem:[#allocation2 + $0xc] sm:$0xf] 0
      %969 = vst [vmem:[#allocation2 + $0x18] sm:$0xf] 0
      %970 = vst [vmem:[#allocation2 + $0x24] sm:$0xf] 0
      %971 = vst [vmem:[#allocation2 + $0x30] sm:$0xf] 0
      %972 = vst [vmem:[#allocation2 + $0x3c] sm:$0xf] 0
      %973 = vst [vmem:[#allocation2 + $0x4] sm:$0xf] %v961
      %974 = vst [vmem:[#allocation2 + $0x10] sm:$0xf] %v962
      %975 = vst [vmem:[#allocation2 + $0x1c] sm:$0xf] %v963
      %976 = vst [vmem:[#allocation2 + $0x28] sm:$0xf] %v964
      %977 = vst [vmem:[#allocation2 + $0x34] sm:$0xf] %v965
      %978 = vst [vmem:[#allocation2 + $0x40] sm:$0xf] %v966
      %979 = vst [vmem:[#allocation2 + $0x8] sm:$0xf] 0
      %980 = vst [vmem:[#allocation2 + $0x14] sm:$0xf] 0
      %981 = vst [vmem:[#allocation2 + $0x20] sm:$0xf] 0
      %982 = vst [vmem:[#allocation2 + $0x2c] sm:$0xf] 0
      %983 = vst [vmem:[#allocation2 + $0x38] sm:$0xf] 0
      %984 = vst [vmem:[#allocation2 + $0x44] sm:$0xf] 0
      %p985 = scmp.eq.s32.totalorder %s22, 0
      // Predicated region
      $region45: #{forward.1} parent=43 // pred_check
        %p986 = pneg %p985
      $region46: #{forward.1} parent=43 // pred_check_branch
        %988 = sbr.rel (%p986) target = $region48
      $region47: #{forward.1} parent=43 // pred_region
        %989 = vst [vmem:[#allocation2] sm:$0xf] 0
        %990 = vst [vmem:[#allocation2 + $0x4] sm:$0xf] 0
        %991 = vst [vmem:[#allocation2 + $0x8] sm:$0xf] 0
      $region48: #{forward.1} parent=43 // pred_fallthru
        _
      %p992 = scmp.eq.s32.totalorder %s22, 1
      // Predicated region
      $region49: #{forward.1} parent=43 // pred_check
        %p993 = pneg %p992
      $region50: #{forward.1} parent=43 // pred_check_branch
        %995 = sbr.rel (%p993) target = $region52
      $region51: #{forward.1} parent=43 // pred_region
        %s996 = scalar_lea.vmem [#allocation2], 60
        %997 = vst [vmem:[%s996] sm:$0xf] 0
        %998 = vst [vmem:[%s996 + $0x4] sm:$0xf] 0
        %999 = vst [vmem:[%s996 + $0x8] sm:$0xf] 0
      $region52: #{forward.1} parent=43 // pred_fallthru
        _
      %v1000 = vld [vmem:[#allocation2] sm:$0xf]
      %v1001 = vld [vmem:[#allocation2 + $0x4] sm:$0xf]
      %v1002 = vld [vmem:[#allocation2 + $0x8] sm:$0xf]
      %v1003 = vld [vmem:[#allocation2 + $0xc] sm:$0xf]
      %v1004 = vld [vmem:[#allocation2 + $0x10] sm:$0xf]
      %v1005 = vld [vmem:[#allocation2 + $0x14] sm:$0xf]
      %v1006 = vld [vmem:[#allocation2 + $0x18] sm:$0xf]
      %v1007 = vld [vmem:[#allocation2 + $0x1c] sm:$0xf]
      %v1008 = vld [vmem:[#allocation2 + $0x20] sm:$0xf]
      %v1009 = vld [vmem:[#allocation2 + $0x24] sm:$0xf]
      %v1010 = vld [vmem:[#allocation2 + $0x28] sm:$0xf]
      %v1011 = vld [vmem:[#allocation2 + $0x2c] sm:$0xf]
      %s1012 = scalar_lea.vmem [#allocation2], 12
      %v1013 = vld [vmem:[%s1012] sm:$0xf]
      %v1014 = vld [vmem:[%s1012 + $0x4] sm:$0xf]
      %v1015 = vld [vmem:[%s1012 + $0x8] sm:$0xf]
      %v1016 = vld [vmem:[%s1012 + $0xc] sm:$0xf]
      %v1017 = vld [vmem:[%s1012 + $0x10] sm:$0xf]
      %v1018 = vld [vmem:[%s1012 + $0x14] sm:$0xf]
      %v1019 = vld [vmem:[%s1012 + $0x18] sm:$0xf]
      %v1020 = vld [vmem:[%s1012 + $0x1c] sm:$0xf]
      %v1021 = vld [vmem:[%s1012 + $0x20] sm:$0xf]
      %v1022 = vld [vmem:[%s1012 + $0x24] sm:$0xf]
      %v1023 = vld [vmem:[%s1012 + $0x28] sm:$0xf]
      %v1024 = vld [vmem:[%s1012 + $0x2c] sm:$0xf]
      %s1025 = scalar_lea.vmem [#allocation2], 24
      %v1026 = vld [vmem:[%s1025] sm:$0xf]
      %v1027 = vld [vmem:[%s1025 + $0x4] sm:$0xf]
      %v1028 = vld [vmem:[%s1025 + $0x8] sm:$0xf]
      %v1029 = vld [vmem:[%s1025 + $0xc] sm:$0xf]
      %v1030 = vld [vmem:[%s1025 + $0x10] sm:$0xf]
      %v1031 = vld [vmem:[%s1025 + $0x14] sm:$0xf]
      %v1032 = vld [vmem:[%s1025 + $0x18] sm:$0xf]
      %v1033 = vld [vmem:[%s1025 + $0x1c] sm:$0xf]
      %v1034 = vld [vmem:[%s1025 + $0x20] sm:$0xf]
      %v1035 = vld [vmem:[%s1025 + $0x24] sm:$0xf]
      %v1036 = vld [vmem:[%s1025 + $0x28] sm:$0xf]
      %v1037 = vld [vmem:[%s1025 + $0x2c] sm:$0xf]
      %v1050 = vunpack.c.l.b16 %v1000
      %v1051 = vunpack.c.l.b16 %v1001
      %v1052 = vunpack.c.l.b16 %v1002
      %v1053 = vunpack.c.l.b16 %v1003
      %v1054 = vunpack.c.l.b16 %v1004
      %v1055 = vunpack.c.l.b16 %v1005
      %v1056 = vunpack.c.l.b16 %v1006
      %v1057 = vunpack.c.l.b16 %v1007
      %v1058 = vunpack.c.l.b16 %v1008
      %v1059 = vunpack.c.l.b16 %v1009
      %v1060 = vunpack.c.l.b16 %v1010
      %v1061 = vunpack.c.l.b16 %v1011
      %v1074 = vunpack.c.l.b16 %v1013
      %v1075 = vunpack.c.l.b16 %v1014
      %v1076 = vunpack.c.l.b16 %v1015
      %v1077 = vunpack.c.l.b16 %v1016
      %v1078 = vunpack.c.l.b16 %v1017
      %v1079 = vunpack.c.l.b16 %v1018
      %v1080 = vunpack.c.l.b16 %v1019
      %v1081 = vunpack.c.l.b16 %v1020
      %v1082 = vunpack.c.l.b16 %v1021
      %v1083 = vunpack.c.l.b16 %v1022
      %v1084 = vunpack.c.l.b16 %v1023
      %v1085 = vunpack.c.l.b16 %v1024
      %v1098 = vunpack.c.l.b16 %v1026
      %v1099 = vunpack.c.l.b16 %v1027
      %v1100 = vunpack.c.l.b16 %v1028
      %v1101 = vunpack.c.l.b16 %v1029
      %v1102 = vunpack.c.l.b16 %v1030
      %v1103 = vunpack.c.l.b16 %v1031
      %v1104 = vunpack.c.l.b16 %v1032
      %v1105 = vunpack.c.l.b16 %v1033
      %v1106 = vunpack.c.l.b16 %v1034
      %v1107 = vunpack.c.l.b16 %v1035
      %v1108 = vunpack.c.l.b16 %v1036
      %v1109 = vunpack.c.l.b16 %v1037
      %v1110 = vpack.c.b16 %v1074, %v1050
      %v1111 = vpack.c.b16 %v1098, %v1098
      %v1112 = vpack.c.b16 %v1075, %v1051
      %v1113 = vpack.c.b16 %v1099, %v1099
      %v1114 = vpack.c.b16 %v1077, %v1053
      %v1115 = vpack.c.b16 %v1101, %v1101
      %v1116 = vpack.c.b16 %v1078, %v1054
      %v1117 = vpack.c.b16 %v1102, %v1102
      %v1118 = vpack.c.b16 %v1080, %v1056
      %v1119 = vpack.c.b16 %v1104, %v1104
      %v1120 = vpack.c.b16 %v1081, %v1057
      %v1121 = vpack.c.b16 %v1105, %v1105
      %v1122 = vpack.c.b16 %v1083, %v1059
      %v1123 = vpack.c.b16 %v1107, %v1107
      %v1124 = vpack.c.b16 %v1084, %v1060
      %v1125 = vpack.c.b16 %v1108, %v1108
      %vm1126 = vsmask.f32 256
      %vm1127 = vsmask.f32 4368
      %vm1128 = vmor %vm1126, %vm1127
      %v1130 = vshrl.u32 %v1110, 16
      %v1132 = vrot.slane %v1130, 7
      %v1133 = vrot.slane %v1132, 4
      %v1135 = vshrl.u32 %v1112, 16
      %v1137 = vrot.slane %v1135, 7
      %v1138 = vshll.u32 %v1112, 16
      %v1140 = vor.u32 %v1137, %v1138
      %v1141 = vsel %vm1128, %v1133, %v1140
      %v1143 = vshrl.u32 %v1111, 16
      %v1145 = vrot.slane %v1143, 7
      %v1146 = vrot.slane %v1145, 4
      %v1148 = vshrl.u32 %v1113, 16
      %v1150 = vrot.slane %v1148, 7
      %v1151 = vshll.u32 %v1113, 16
      %v1153 = vor.u32 %v1150, %v1151
      %v1154 = vsel %vm1128, %v1146, %v1153
      %v1156 = vshrl.u32 %v1114, 16
      %v1158 = vrot.slane %v1156, 7
      %v1159 = vrot.slane %v1158, 4
      %v1161 = vshrl.u32 %v1116, 16
      %v1163 = vrot.slane %v1161, 7
      %v1164 = vshll.u32 %v1116, 16
      %v1166 = vor.u32 %v1163, %v1164
      %v1167 = vsel %vm1128, %v1159, %v1166
      %v1169 = vshrl.u32 %v1115, 16
      %v1171 = vrot.slane %v1169, 7
      %v1172 = vrot.slane %v1171, 4
      %v1174 = vshrl.u32 %v1117, 16
      %v1176 = vrot.slane %v1174, 7
      %v1177 = vshll.u32 %v1117, 16
      %v1179 = vor.u32 %v1176, %v1177
      %v1180 = vsel %vm1128, %v1172, %v1179
      %v1182 = vshrl.u32 %v1118, 16
      %v1184 = vrot.slane %v1182, 7
      %v1185 = vrot.slane %v1184, 4
      %v1187 = vshrl.u32 %v1120, 16
      %v1189 = vrot.slane %v1187, 7
      %v1190 = vshll.u32 %v1120, 16
      %v1192 = vor.u32 %v1189, %v1190
      %v1193 = vsel %vm1128, %v1185, %v1192
      %v1195 = vshrl.u32 %v1119, 16
      %v1197 = vrot.slane %v1195, 7
      %v1198 = vrot.slane %v1197, 4
      %v1200 = vshrl.u32 %v1121, 16
      %v1202 = vrot.slane %v1200, 7
      %v1203 = vshll.u32 %v1121, 16
      %v1205 = vor.u32 %v1202, %v1203
      %v1206 = vsel %vm1128, %v1198, %v1205
      %v1208 = vshrl.u32 %v1122, 16
      %v1210 = vrot.slane %v1208, 7
      %v1211 = vrot.slane %v1210, 4
      %v1213 = vshrl.u32 %v1124, 16
      %v1215 = vrot.slane %v1213, 7
      %v1216 = vshll.u32 %v1124, 16
      %v1218 = vor.u32 %v1215, %v1216
      %v1219 = vsel %vm1128, %v1211, %v1218
      %v1221 = vshrl.u32 %v1123, 16
      %v1223 = vrot.slane %v1221, 7
      %v1224 = vrot.slane %v1223, 4
      %v1226 = vshrl.u32 %v1125, 16
      %v1228 = vrot.slane %v1226, 7
      %v1229 = vshll.u32 %v1125, 16
      %v1231 = vor.u32 %v1228, %v1229
      %v1232 = vsel %vm1128, %v1224, %v1231
      %v1233 = vld [vmem:[%s4] sm:$0xf]
      %v1234 = vld [vmem:[%s4 + $0x4] sm:$0xf]
      %v1235 = vld [vmem:[%s4 + $0x8] sm:$0xf]
      %v1236 = vld [vmem:[%s4 + $0xc] sm:$0xf]
      %v1237 = vld [vmem:[%s4 + $0x10] sm:$0xf]
      %v1238 = vld [vmem:[%s4 + $0x14] sm:$0xf]
      %v1239 = vld [vmem:[%s4 + $0x18] sm:$0xf]
      %v1240 = vld [vmem:[%s4 + $0x1c] sm:$0xf]
      %v1241 = vld [vmem:[%s4 + $0x20] sm:$0xf]
      %v1242 = vld [vmem:[%s4 + $0x24] sm:$0xf]
      %v1243 = vld [vmem:[%s4 + $0x28] sm:$0xf]
      %v1244 = vld [vmem:[%s4 + $0x2c] sm:$0xf]
      %v1245 = vld [vmem:[%s4 + $0x30] sm:$0xf]
      %v1246 = vld [vmem:[%s4 + $0x34] sm:$0xf]
      %v1247 = vld [vmem:[%s4 + $0x38] sm:$0xf]
      %v1248 = vld [vmem:[%s4 + $0x3c] sm:$0xf]
      %v1249 = vld [vmem:[%s4 + $0x40] sm:$0xf]
      %v1250 = vld [vmem:[%s4 + $0x44] sm:$0xf]
      %v1251 = vld [vmem:[%s4 + $0x48] sm:$0xf]
      %v1252 = vld [vmem:[%s4 + $0x4c] sm:$0xf]
      %v1253 = vld [vmem:[%s4 + $0x50] sm:$0xf]
      %v1254 = vld [vmem:[%s4 + $0x54] sm:$0xf]
      %v1255 = vld [vmem:[%s4 + $0x58] sm:$0xf]
      %v1256 = vld [vmem:[%s4 + $0x5c] sm:$0xf]
      %v1257 = vld [vmem:[%s4 + $0x60] sm:$0xf]
      %v1258 = vld [vmem:[%s4 + $0x64] sm:$0xf]
      %v1259 = vld [vmem:[%s4 + $0x68] sm:$0xf]
      %v1260 = vld [vmem:[%s4 + $0x6c] sm:$0xf]
      %v1261 = vld [vmem:[%s4 + $0x70] sm:$0xf]
      %v1262 = vld [vmem:[%s4 + $0x74] sm:$0xf]
      %v1263 = vld [vmem:[%s4 + $0x78] sm:$0xf]
      %v1264 = vld [vmem:[%s4 + $0x7c] sm:$0xf]
      %v1265 = vld [vmem:[%s4 + $0x80] sm:$0xf]
      %v1266 = vld [vmem:[%s4 + $0x84] sm:$0xf]
      %v1267 = vld [vmem:[%s4 + $0x88] sm:$0xf]
      %v1268 = vld [vmem:[%s4 + $0x8c] sm:$0xf]
      %v1269 = vld [vmem:[%s4 + $0x90] sm:$0xf]
      %v1270 = vld [vmem:[%s4 + $0x94] sm:$0xf]
      %v1271 = vld [vmem:[%s4 + $0x98] sm:$0xf]
      %v1272 = vld [vmem:[%s4 + $0x9c] sm:$0xf]
      %v1273 = vld [vmem:[%s4 + $0xa0] sm:$0xf]
      %v1274 = vld [vmem:[%s4 + $0xa4] sm:$0xf]
      %v1275 = vld [vmem:[%s4 + $0xa8] sm:$0xf]
      %v1276 = vld [vmem:[%s4 + $0xac] sm:$0xf]
      %v1277 = vld [vmem:[%s4 + $0xb0] sm:$0xf]
      %v1278 = vld [vmem:[%s4 + $0xb4] sm:$0xf]
      %v1279 = vld [vmem:[%s4 + $0xb8] sm:$0xf]
      %v1280 = vld [vmem:[%s4 + $0xbc] sm:$0xf]
      %v1281 = vunpack.c.l.b16 %v1141
      %v1282 = vunpack.c.h.b16 %v1141
      %v1283 = vunpack.c.l.b16 %v1154
      %v1284 = vunpack.c.l.b16 %v1167
      %v1285 = vunpack.c.h.b16 %v1167
      %v1286 = vunpack.c.l.b16 %v1180
      %v1287 = vunpack.c.l.b16 %v1193
      %v1288 = vunpack.c.h.b16 %v1193
      %v1289 = vunpack.c.l.b16 %v1206
      %v1290 = vunpack.c.l.b16 %v1219
      %v1291 = vunpack.c.h.b16 %v1219
      %v1292 = vunpack.c.l.b16 %v1232
      %v1293 = vpack.c.b16 %v1284, %v1281
      %v1294 = vpack.c.b16 %v1285, %v1282
      %v1295 = vpack.c.b16 %v1286, %v1283
      %v1296 = vpack.c.b16 %v1290, %v1287
      %v1297 = vpack.c.b16 %v1291, %v1288
      %v1298 = vpack.c.b16 %v1292, %v1289
      %v1353 = vunpack.c.l.b16 %v1233
      %v1354 = vunpack.c.l.b16 %v1234
      %v1355 = vunpack.c.l.b16 %v1235
      %v1356 = vunpack.c.l.b16 %v1236
      %v1357 = vunpack.c.l.b16 %v1237
      %v1358 = vunpack.c.l.b16 %v1238
      %v1359 = vunpack.c.l.b16 %v1239
      %v1360 = vunpack.c.l.b16 %v1240
      %v1361 = vunpack.c.l.b16 %v1241
      %v1362 = vunpack.c.l.b16 %v1242
      %v1363 = vunpack.c.l.b16 %v1243
      %v1364 = vunpack.c.l.b16 %v1244
      %v1365 = vunpack.c.l.b16 %v1245
      %v1366 = vunpack.c.l.b16 %v1246
      %v1367 = vunpack.c.l.b16 %v1247
      %v1368 = vunpack.c.l.b16 %v1248
      %v1369 = vunpack.c.l.b16 %v1249
      %v1370 = vunpack.c.l.b16 %v1250
      %v1371 = vunpack.c.l.b16 %v1251
      %v1372 = vunpack.c.l.b16 %v1252
      %v1373 = vunpack.c.l.b16 %v1253
      %v1374 = vunpack.c.l.b16 %v1254
      %v1375 = vunpack.c.l.b16 %v1255
      %v1376 = vunpack.c.l.b16 %v1256
      %v1377 = vunpack.c.l.b16 %v1257
      %v1378 = vunpack.c.l.b16 %v1258
      %v1379 = vunpack.c.l.b16 %v1259
      %v1380 = vunpack.c.l.b16 %v1260
      %v1381 = vunpack.c.l.b16 %v1261
      %v1382 = vunpack.c.l.b16 %v1262
      %v1383 = vunpack.c.l.b16 %v1263
      %v1384 = vunpack.c.l.b16 %v1264
      %v1385 = vunpack.c.l.b16 %v1265
      %v1386 = vunpack.c.l.b16 %v1266
      %v1387 = vunpack.c.l.b16 %v1267
      %v1388 = vunpack.c.l.b16 %v1268
      %v1389 = vunpack.c.l.b16 %v1269
      %v1390 = vunpack.c.l.b16 %v1270
      %v1391 = vunpack.c.l.b16 %v1271
      %v1392 = vunpack.c.l.b16 %v1272
      %v1393 = vunpack.c.l.b16 %v1273
      %v1394 = vunpack.c.l.b16 %v1274
      %v1395 = vunpack.c.l.b16 %v1275
      %v1396 = vunpack.c.l.b16 %v1276
      %v1397 = vunpack.c.l.b16 %v1277
      %v1398 = vunpack.c.l.b16 %v1278
      %v1399 = vunpack.c.l.b16 %v1279
      %v1400 = vunpack.c.l.b16 %v1280
      %v1401 = vpack.c.b16 %v1354, %v1353
      %v1402 = vpack.c.b16 %v1356, %v1355
      %v1403 = vpack.c.b16 %v1358, %v1357
      %v1404 = vpack.c.b16 %v1360, %v1359
      %v1405 = vpack.c.b16 %v1362, %v1361
      %v1406 = vpack.c.b16 %v1364, %v1363
      %v1407 = vpack.c.b16 %v1366, %v1365
      %v1408 = vpack.c.b16 %v1368, %v1367
      %v1409 = vpack.c.b16 %v1370, %v1369
      %v1410 = vpack.c.b16 %v1372, %v1371
      %v1411 = vpack.c.b16 %v1374, %v1373
      %v1412 = vpack.c.b16 %v1376, %v1375
      %v1413 = vpack.c.b16 %v1378, %v1377
      %v1414 = vpack.c.b16 %v1380, %v1379
      %v1415 = vpack.c.b16 %v1382, %v1381
      %v1416 = vpack.c.b16 %v1384, %v1383
      %v1417 = vpack.c.b16 %v1386, %v1385
      %v1418 = vpack.c.b16 %v1388, %v1387
      %v1419 = vpack.c.b16 %v1390, %v1389
      %v1420 = vpack.c.b16 %v1392, %v1391
      %v1421 = vpack.c.b16 %v1394, %v1393
      %v1422 = vpack.c.b16 %v1396, %v1395
      %v1423 = vpack.c.b16 %v1398, %v1397
      %v1424 = vpack.c.b16 %v1400, %v1399
      %1449 = vmatprep.subr.bf16.mxu0 0
      %1450 = vmatpush1.bf16.msra.mxu0 %v1408
      %1451 = vmatprep.subr.bf16.mxu0 0
      %1452 = vmatpush1.bf16.msra.mxu0 %v1407
      %1453 = vmatprep.subr.bf16.mxu0 0
      %1454 = vmatpush1.bf16.msra.mxu0 %v1406
      %1455 = vmatprep.subr.bf16.mxu0 0
      %1456 = vmatpush1.bf16.msra.mxu0 %v1405
      %1457 = vmatprep.subr.bf16.mxu0 0
      %1458 = vmatpush1.bf16.msra.mxu0 %v1404
      %1459 = vmatprep.subr.bf16.mxu0 0
      %1460 = vmatpush1.bf16.msra.mxu0 %v1403
      %1461 = vmatprep.subr.bf16.mxu0 0
      %1462 = vmatpush1.bf16.msra.mxu0 %v1402
      %1463 = vmatprep.subr.bf16.mxu0 0
      %1464 = vmatpush1.bf16.msra.mxu0 %v1401
      %1465 = vmatprep.subr.bf16.mxu0 0
      %1466 = vmatpush2.bf16.msra.mxu0 %v1416
      %1467 = vmatprep.subr.bf16.mxu0 0
      %1468 = vmatpush2.bf16.msra.mxu0 %v1415
      %1469 = vmatprep.subr.bf16.mxu0 0
      %1470 = vmatpush2.bf16.msra.mxu0 %v1414
      %1471 = vmatprep.subr.bf16.mxu0 0
      %1472 = vmatpush2.bf16.msra.mxu0 %v1413
      %1473 = vmatprep.subr.bf16.mxu0 0
      %1474 = vmatpush2.bf16.msra.mxu0 %v1412
      %1475 = vmatprep.subr.bf16.mxu0 0
      %1476 = vmatpush2.bf16.msra.mxu0 %v1411
      %1477 = vmatprep.subr.bf16.mxu0 0
      %1478 = vmatpush2.bf16.msra.mxu0 %v1410
      %1479 = vmatprep.subr.bf16.mxu0 0
      %1480 = vmatpush2.bf16.msra.mxu0 %v1409
      %1481 = vmatprep.mubr.bf16.mxu0 %v1294
      %1482 = vmatmul.mubr.bf16.gmra.mxu0 %v1293
      %v1483 = vpop.f32.mrf.mxu0
      %v1484 = vadd.f32 0.0, %v1483
      %v1485 = vpop.f32.mrf.mxu0
      %v1486 = vpop.f32.mrf.mxu0
      %v1487 = vadd.f32 0.0, %v1486
      %v1488 = vpop.f32.mrf.mxu0
      %1489 = vmatprep.mubr.bf16.mxu0 %v1297
      %1490 = vmatmul.mubr.bf16.gmra.mxu0 %v1296
      %v1491 = vpop.f32.mrf.mxu0
      %v1492 = vadd.f32 0.0, %v1491
      %v1493 = vpop.f32.mrf.mxu0
      %v1494 = vpop.f32.mrf.mxu0
      %v1495 = vadd.f32 0.0, %v1494
      %v1496 = vpop.f32.mrf.mxu0
      %1497 = vdwg.mxu0
      %1498 = vmatprep.subr.bf16.mxu0 0
      %1499 = vmatpush1.bf16.msra.mxu0 %v1424
      %1500 = vmatprep.subr.bf16.mxu0 0
      %1501 = vmatpush1.bf16.msra.mxu0 %v1423
      %1502 = vmatprep.subr.bf16.mxu0 0
      %1503 = vmatpush1.bf16.msra.mxu0 %v1422
      %1504 = vmatprep.subr.bf16.mxu0 0
      %1505 = vmatpush1.bf16.msra.mxu0 %v1421
      %1506 = vmatprep.subr.bf16.mxu0 0
      %1507 = vmatpush1.bf16.msra.mxu0 %v1420
      %1508 = vmatprep.subr.bf16.mxu0 0
      %1509 = vmatpush1.bf16.msra.mxu0 %v1419
      %1510 = vmatprep.subr.bf16.mxu0 0
      %1511 = vmatpush1.bf16.msra.mxu0 %v1418
      %1512 = vmatprep.subr.bf16.mxu0 0
      %1513 = vmatpush1.bf16.msra.mxu0 %v1417
      %1514 = vmatprep.subr.bf16.mxu0 0
      %1515 = vmatpush2.bf16.msra.mxu0 0
      %1516 = vmatprep.subr.bf16.mxu0 0
      %1517 = vmatpush2.bf16.msra.mxu0 0
      %1518 = vmatprep.subr.bf16.mxu0 0
      %1519 = vmatpush2.bf16.msra.mxu0 0
      %1520 = vmatprep.subr.bf16.mxu0 0
      %1521 = vmatpush2.bf16.msra.mxu0 0
      %1522 = vmatprep.subr.bf16.mxu0 0
      %1523 = vmatpush2.bf16.msra.mxu0 0
      %1524 = vmatprep.subr.bf16.mxu0 0
      %1525 = vmatpush2.bf16.msra.mxu0 0
      %1526 = vmatprep.subr.bf16.mxu0 0
      %1527 = vmatpush2.bf16.msra.mxu0 0
      %1528 = vmatprep.subr.bf16.mxu0 0
      %1529 = vmatpush2.bf16.msra.mxu0 0
      %1530 = vmatprep.mubr.bf16.mxu0 0
      %1531 = vmatmul.mubr.bf16.gmra.mxu0 %v1295
      %v1532 = vpop.f32.mrf.mxu0
      %v1533 = vadd.f32 %v1484, %v1532
      %v1534 = vpop.f32.mrf.mxu0
      %v1535 = vpop.f32.mrf.mxu0
      %v1536 = vadd.f32 %v1487, %v1535
      %v1537 = vpop.f32.mrf.mxu0
      %1538 = vmatprep.mubr.bf16.mxu0 0
      %1539 = vmatmul.mubr.bf16.gmra.mxu0 %v1298
      %v1540 = vpop.f32.mrf.mxu0
      %v1541 = vadd.f32 %v1492, %v1540
      %v1542 = vpop.f32.mrf.mxu0
      %v1543 = vpop.f32.mrf.mxu0
      %v1544 = vadd.f32 %v1495, %v1543
      %v1545 = vpop.f32.mrf.mxu0
      %1546 = vdwg.mxu0
      %v1547 = vadd.f32 %v607, %v1533
      %v1548 = vadd.f32 %v613, %v1536
      %v1549 = vadd.f32 %v617, %v1541
      %v1550 = vadd.f32 %v623, %v1544
      %s1551 = scalar_lea.vmem %s4, 192
      %v1552 = vld [vmem:[%s1551] sm:$0xf]
      %v1553 = vld [vmem:[%s1551 + $0x4] sm:$0xf]
      %v1554 = vld [vmem:[%s1551 + $0x8] sm:$0xf]
      %v1555 = vld [vmem:[%s1551 + $0xc] sm:$0xf]
      %v1556 = vld [vmem:[%s1551 + $0x10] sm:$0xf]
      %v1557 = vld [vmem:[%s1551 + $0x14] sm:$0xf]
      %v1558 = vld [vmem:[%s1551 + $0x18] sm:$0xf]
      %v1559 = vld [vmem:[%s1551 + $0x1c] sm:$0xf]
      %v1560 = vld [vmem:[%s1551 + $0x20] sm:$0xf]
      %v1561 = vld [vmem:[%s1551 + $0x24] sm:$0xf]
      %v1562 = vld [vmem:[%s1551 + $0x28] sm:$0xf]
      %v1563 = vld [vmem:[%s1551 + $0x2c] sm:$0xf]
      %v1564 = vld [vmem:[%s1551 + $0x30] sm:$0xf]
      %v1565 = vld [vmem:[%s1551 + $0x34] sm:$0xf]
      %v1566 = vld [vmem:[%s1551 + $0x38] sm:$0xf]
      %v1567 = vld [vmem:[%s1551 + $0x3c] sm:$0xf]
      %v1568 = vld [vmem:[%s1551 + $0x40] sm:$0xf]
      %v1569 = vld [vmem:[%s1551 + $0x44] sm:$0xf]
      %v1570 = vld [vmem:[%s1551 + $0x48] sm:$0xf]
      %v1571 = vld [vmem:[%s1551 + $0x4c] sm:$0xf]
      %v1572 = vld [vmem:[%s1551 + $0x50] sm:$0xf]
      %v1573 = vld [vmem:[%s1551 + $0x54] sm:$0xf]
      %v1574 = vld [vmem:[%s1551 + $0x58] sm:$0xf]
      %v1575 = vld [vmem:[%s1551 + $0x5c] sm:$0xf]
      %v1576 = vld [vmem:[%s1551 + $0x60] sm:$0xf]
      %v1577 = vld [vmem:[%s1551 + $0x64] sm:$0xf]
      %v1578 = vld [vmem:[%s1551 + $0x68] sm:$0xf]
      %v1579 = vld [vmem:[%s1551 + $0x6c] sm:$0xf]
      %v1580 = vld [vmem:[%s1551 + $0x70] sm:$0xf]
      %v1581 = vld [vmem:[%s1551 + $0x74] sm:$0xf]
      %v1582 = vld [vmem:[%s1551 + $0x78] sm:$0xf]
      %v1583 = vld [vmem:[%s1551 + $0x7c] sm:$0xf]
      %v1584 = vld [vmem:[%s1551 + $0x80] sm:$0xf]
      %v1585 = vld [vmem:[%s1551 + $0x84] sm:$0xf]
      %v1586 = vld [vmem:[%s1551 + $0x88] sm:$0xf]
      %v1587 = vld [vmem:[%s1551 + $0x8c] sm:$0xf]
      %v1588 = vld [vmem:[%s1551 + $0x90] sm:$0xf]
      %v1589 = vld [vmem:[%s1551 + $0x94] sm:$0xf]
      %v1590 = vld [vmem:[%s1551 + $0x98] sm:$0xf]
      %v1591 = vld [vmem:[%s1551 + $0x9c] sm:$0xf]
      %v1592 = vld [vmem:[%s1551 + $0xa0] sm:$0xf]
      %v1593 = vld [vmem:[%s1551 + $0xa4] sm:$0xf]
      %v1594 = vld [vmem:[%s1551 + $0xa8] sm:$0xf]
      %v1595 = vld [vmem:[%s1551 + $0xac] sm:$0xf]
      %v1596 = vld [vmem:[%s1551 + $0xb0] sm:$0xf]
      %v1597 = vld [vmem:[%s1551 + $0xb4] sm:$0xf]
      %v1598 = vld [vmem:[%s1551 + $0xb8] sm:$0xf]
      %v1599 = vld [vmem:[%s1551 + $0xbc] sm:$0xf]
      %v1600 = vpack.c.b16 %v1054, %v1051
      %v1601 = vpack.c.b16 %v1078, %v1075
      %v1602 = vpack.c.b16 %v1102, %v1099
      %v1603 = vpack.c.b16 %v1060, %v1057
      %v1604 = vpack.c.b16 %v1084, %v1081
      %v1605 = vpack.c.b16 %v1108, %v1105
      %v1660 = vunpack.c.l.b16 %v1552
      %v1661 = vunpack.c.l.b16 %v1553
      %v1662 = vunpack.c.l.b16 %v1554
      %v1663 = vunpack.c.l.b16 %v1555
      %v1664 = vunpack.c.l.b16 %v1556
      %v1665 = vunpack.c.l.b16 %v1557
      %v1666 = vunpack.c.l.b16 %v1558
      %v1667 = vunpack.c.l.b16 %v1559
      %v1668 = vunpack.c.l.b16 %v1560
      %v1669 = vunpack.c.l.b16 %v1561
      %v1670 = vunpack.c.l.b16 %v1562
      %v1671 = vunpack.c.l.b16 %v1563
      %v1672 = vunpack.c.l.b16 %v1564
      %v1673 = vunpack.c.l.b16 %v1565
      %v1674 = vunpack.c.l.b16 %v1566
      %v1675 = vunpack.c.l.b16 %v1567
      %v1676 = vunpack.c.l.b16 %v1568
      %v1677 = vunpack.c.l.b16 %v1569
      %v1678 = vunpack.c.l.b16 %v1570
      %v1679 = vunpack.c.l.b16 %v1571
      %v1680 = vunpack.c.l.b16 %v1572
      %v1681 = vunpack.c.l.b16 %v1573
      %v1682 = vunpack.c.l.b16 %v1574
      %v1683 = vunpack.c.l.b16 %v1575
      %v1684 = vunpack.c.l.b16 %v1576
      %v1685 = vunpack.c.l.b16 %v1577
      %v1686 = vunpack.c.l.b16 %v1578
      %v1687 = vunpack.c.l.b16 %v1579
      %v1688 = vunpack.c.l.b16 %v1580
      %v1689 = vunpack.c.l.b16 %v1581
      %v1690 = vunpack.c.l.b16 %v1582
      %v1691 = vunpack.c.l.b16 %v1583
      %v1692 = vunpack.c.l.b16 %v1584
      %v1693 = vunpack.c.l.b16 %v1585
      %v1694 = vunpack.c.l.b16 %v1586
      %v1695 = vunpack.c.l.b16 %v1587
      %v1696 = vunpack.c.l.b16 %v1588
      %v1697 = vunpack.c.l.b16 %v1589
      %v1698 = vunpack.c.l.b16 %v1590
      %v1699 = vunpack.c.l.b16 %v1591
      %v1700 = vunpack.c.l.b16 %v1592
      %v1701 = vunpack.c.l.b16 %v1593
      %v1702 = vunpack.c.l.b16 %v1594
      %v1703 = vunpack.c.l.b16 %v1595
      %v1704 = vunpack.c.l.b16 %v1596
      %v1705 = vunpack.c.l.b16 %v1597
      %v1706 = vunpack.c.l.b16 %v1598
      %v1707 = vunpack.c.l.b16 %v1599
      %v1708 = vpack.c.b16 %v1661, %v1660
      %v1709 = vpack.c.b16 %v1663, %v1662
      %v1710 = vpack.c.b16 %v1665, %v1664
      %v1711 = vpack.c.b16 %v1667, %v1666
      %v1712 = vpack.c.b16 %v1669, %v1668
      %v1713 = vpack.c.b16 %v1671, %v1670
      %v1714 = vpack.c.b16 %v1673, %v1672
      %v1715 = vpack.c.b16 %v1675, %v1674
      %v1716 = vpack.c.b16 %v1677, %v1676
      %v1717 = vpack.c.b16 %v1679, %v1678
      %v1718 = vpack.c.b16 %v1681, %v1680
      %v1719 = vpack.c.b16 %v1683, %v1682
      %v1720 = vpack.c.b16 %v1685, %v1684
      %v1721 = vpack.c.b16 %v1687, %v1686
      %v1722 = vpack.c.b16 %v1689, %v1688
      %v1723 = vpack.c.b16 %v1691, %v1690
      %v1724 = vpack.c.b16 %v1693, %v1692
      %v1725 = vpack.c.b16 %v1695, %v1694
      %v1726 = vpack.c.b16 %v1697, %v1696
      %v1727 = vpack.c.b16 %v1699, %v1698
      %v1728 = vpack.c.b16 %v1701, %v1700
      %v1729 = vpack.c.b16 %v1703, %v1702
      %v1730 = vpack.c.b16 %v1705, %v1704
      %v1731 = vpack.c.b16 %v1707, %v1706
      %1756 = vmatprep.subr.bf16.mxu0 0
      %1757 = vmatpush1.bf16.msra.mxu0 %v1715
      %1758 = vmatprep.subr.bf16.mxu0 0
      %1759 = vmatpush1.bf16.msra.mxu0 %v1714
      %1760 = vmatprep.subr.bf16.mxu0 0
      %1761 = vmatpush1.bf16.msra.mxu0 %v1713
      %1762 = vmatprep.subr.bf16.mxu0 0
      %1763 = vmatpush1.bf16.msra.mxu0 %v1712
      %1764 = vmatprep.subr.bf16.mxu0 0
      %1765 = vmatpush1.bf16.msra.mxu0 %v1711
      %1766 = vmatprep.subr.bf16.mxu0 0
      %1767 = vmatpush1.bf16.msra.mxu0 %v1710
      %1768 = vmatprep.subr.bf16.mxu0 0
      %1769 = vmatpush1.bf16.msra.mxu0 %v1709
      %1770 = vmatprep.subr.bf16.mxu0 0
      %1771 = vmatpush1.bf16.msra.mxu0 %v1708
      %1772 = vmatprep.subr.bf16.mxu0 0
      %1773 = vmatpush2.bf16.msra.mxu0 %v1723
      %1774 = vmatprep.subr.bf16.mxu0 0
      %1775 = vmatpush2.bf16.msra.mxu0 %v1722
      %1776 = vmatprep.subr.bf16.mxu0 0
      %1777 = vmatpush2.bf16.msra.mxu0 %v1721
      %1778 = vmatprep.subr.bf16.mxu0 0
      %1779 = vmatpush2.bf16.msra.mxu0 %v1720
      %1780 = vmatprep.subr.bf16.mxu0 0
      %1781 = vmatpush2.bf16.msra.mxu0 %v1719
      %1782 = vmatprep.subr.bf16.mxu0 0
      %1783 = vmatpush2.bf16.msra.mxu0 %v1718
      %1784 = vmatprep.subr.bf16.mxu0 0
      %1785 = vmatpush2.bf16.msra.mxu0 %v1717
      %1786 = vmatprep.subr.bf16.mxu0 0
      %1787 = vmatpush2.bf16.msra.mxu0 %v1716
      %1788 = vmatprep.mubr.bf16.mxu0 %v1601
      %1789 = vmatmul.mubr.bf16.gmra.mxu0 %v1600
      %v1790 = vpop.f32.mrf.mxu0
      %v1791 = vadd.f32 0.0, %v1790
      %v1792 = vpop.f32.mrf.mxu0
      %v1793 = vpop.f32.mrf.mxu0
      %v1794 = vadd.f32 0.0, %v1793
      %v1795 = vpop.f32.mrf.mxu0
      %1796 = vmatprep.mubr.bf16.mxu0 %v1604
      %1797 = vmatmul.mubr.bf16.gmra.mxu0 %v1603
      %v1798 = vpop.f32.mrf.mxu0
      %v1799 = vadd.f32 0.0, %v1798
      %v1800 = vpop.f32.mrf.mxu0
      %v1801 = vpop.f32.mrf.mxu0
      %v1802 = vadd.f32 0.0, %v1801
      %v1803 = vpop.f32.mrf.mxu0
      %1804 = vdwg.mxu0
      %1805 = vmatprep.subr.bf16.mxu0 0
      %1806 = vmatpush1.bf16.msra.mxu0 %v1731
      %1807 = vmatprep.subr.bf16.mxu0 0
      %1808 = vmatpush1.bf16.msra.mxu0 %v1730
      %1809 = vmatprep.subr.bf16.mxu0 0
      %1810 = vmatpush1.bf16.msra.mxu0 %v1729
      %1811 = vmatprep.subr.bf16.mxu0 0
      %1812 = vmatpush1.bf16.msra.mxu0 %v1728
      %1813 = vmatprep.subr.bf16.mxu0 0
      %1814 = vmatpush1.bf16.msra.mxu0 %v1727
      %1815 = vmatprep.subr.bf16.mxu0 0
      %1816 = vmatpush1.bf16.msra.mxu0 %v1726
      %1817 = vmatprep.subr.bf16.mxu0 0
      %1818 = vmatpush1.bf16.msra.mxu0 %v1725
      %1819 = vmatprep.subr.bf16.mxu0 0
      %1820 = vmatpush1.bf16.msra.mxu0 %v1724
      %1821 = vmatprep.subr.bf16.mxu0 0
      %1822 = vmatpush2.bf16.msra.mxu0 0
      %1823 = vmatprep.subr.bf16.mxu0 0
      %1824 = vmatpush2.bf16.msra.mxu0 0
      %1825 = vmatprep.subr.bf16.mxu0 0
      %1826 = vmatpush2.bf16.msra.mxu0 0
      %1827 = vmatprep.subr.bf16.mxu0 0
      %1828 = vmatpush2.bf16.msra.mxu0 0
      %1829 = vmatprep.subr.bf16.mxu0 0
      %1830 = vmatpush2.bf16.msra.mxu0 0
      %1831 = vmatprep.subr.bf16.mxu0 0
      %1832 = vmatpush2.bf16.msra.mxu0 0
      %1833 = vmatprep.subr.bf16.mxu0 0
      %1834 = vmatpush2.bf16.msra.mxu0 0
      %1835 = vmatprep.subr.bf16.mxu0 0
      %1836 = vmatpush2.bf16.msra.mxu0 0
      %1837 = vmatprep.mubr.bf16.mxu0 0
      %1838 = vmatmul.mubr.bf16.gmra.mxu0 %v1602
      %v1839 = vpop.f32.mrf.mxu0
      %v1840 = vadd.f32 %v1791, %v1839
      %v1841 = vpop.f32.mrf.mxu0
      %v1842 = vpop.f32.mrf.mxu0
      %v1843 = vadd.f32 %v1794, %v1842
      %v1844 = vpop.f32.mrf.mxu0
      %1845 = vmatprep.mubr.bf16.mxu0 0
      %1846 = vmatmul.mubr.bf16.gmra.mxu0 %v1605
      %v1847 = vpop.f32.mrf.mxu0
      %v1848 = vadd.f32 %v1799, %v1847
      %v1849 = vpop.f32.mrf.mxu0
      %v1850 = vpop.f32.mrf.mxu0
      %v1851 = vadd.f32 %v1802, %v1850
      %v1852 = vpop.f32.mrf.mxu0
      %1853 = vdwg.mxu0
      %v1854 = vadd.f32 %v1547, %v1840
      %v1855 = vadd.f32 %v1548, %v1843
      %v1856 = vadd.f32 %v1549, %v1848
      %v1857 = vadd.f32 %v1550, %v1851
      %v1858 = vpack.c.b16 %v1076, %v1052
      %v1859 = vpack.c.b16 %v1100, %v1100
      %v1860 = vpack.c.b16 %v1079, %v1055
      %v1861 = vpack.c.b16 %v1103, %v1103
      %v1862 = vpack.c.b16 %v1082, %v1058
      %v1863 = vpack.c.b16 %v1106, %v1106
      %v1864 = vpack.c.b16 %v1085, %v1061
      %v1865 = vpack.c.b16 %v1109, %v1109
      %v1866 = vrot.slane %v1135, 4
      %v1867 = vrot.slane %v1138, 5
      %v1868 = vor.u32 %v1866, %v1867
      %v1869 = vrot.slane %v1868, 4
      %v1871 = vshll.u32 %v1858, 16
      %v1873 = vrot.slane %v1871, 5
      %v1874 = vsel %vm642, %v1869, %v1873
      %v1875 = vrot.slane %v1148, 4
      %v1876 = vrot.slane %v1151, 5
      %v1877 = vor.u32 %v1875, %v1876
      %v1878 = vrot.slane %v1877, 4
      %v1880 = vshll.u32 %v1859, 16
      %v1882 = vrot.slane %v1880, 5
      %v1883 = vsel %vm642, %v1878, %v1882
      %v1884 = vrot.slane %v1161, 4
      %v1885 = vrot.slane %v1164, 5
      %v1886 = vor.u32 %v1884, %v1885
      %v1887 = vrot.slane %v1886, 4
      %v1889 = vshll.u32 %v1860, 16
      %v1891 = vrot.slane %v1889, 5
      %v1892 = vsel %vm642, %v1887, %v1891
      %v1893 = vrot.slane %v1174, 4
      %v1894 = vrot.slane %v1177, 5
      %v1895 = vor.u32 %v1893, %v1894
      %v1896 = vrot.slane %v1895, 4
      %v1898 = vshll.u32 %v1861, 16
      %v1900 = vrot.slane %v1898, 5
      %v1901 = vsel %vm642, %v1896, %v1900
      %v1902 = vrot.slane %v1187, 4
      %v1903 = vrot.slane %v1190, 5
      %v1904 = vor.u32 %v1902, %v1903
      %v1905 = vrot.slane %v1904, 4
      %v1907 = vshll.u32 %v1862, 16
      %v1909 = vrot.slane %v1907, 5
      %v1910 = vsel %vm642, %v1905, %v1909
      %v1911 = vrot.slane %v1200, 4
      %v1912 = vrot.slane %v1203, 5
      %v1913 = vor.u32 %v1911, %v1912
      %v1914 = vrot.slane %v1913, 4
      %v1916 = vshll.u32 %v1863, 16
      %v1918 = vrot.slane %v1916, 5
      %v1919 = vsel %vm642, %v1914, %v1918
      %v1920 = vrot.slane %v1213, 4
      %v1921 = vrot.slane %v1216, 5
      %v1922 = vor.u32 %v1920, %v1921
      %v1923 = vrot.slane %v1922, 4
      %v1925 = vshll.u32 %v1864, 16
      %v1927 = vrot.slane %v1925, 5
      %v1928 = vsel %vm642, %v1923, %v1927
      %v1929 = vrot.slane %v1226, 4
      %v1930 = vrot.slane %v1229, 5
      %v1931 = vor.u32 %v1929, %v1930
      %v1932 = vrot.slane %v1931, 4
      %v1934 = vshll.u32 %v1865, 16
      %v1936 = vrot.slane %v1934, 5
      %v1937 = vsel %vm642, %v1932, %v1936
      %s1938 = scalar_lea.vmem %s4, 384
      %v1939 = vld [vmem:[%s1938] sm:$0xf]
      %v1940 = vld [vmem:[%s1938 + $0x4] sm:$0xf]
      %v1941 = vld [vmem:[%s1938 + $0x8] sm:$0xf]
      %v1942 = vld [vmem:[%s1938 + $0xc] sm:$0xf]
      %v1943 = vld [vmem:[%s1938 + $0x10] sm:$0xf]
      %v1944 = vld [vmem:[%s1938 + $0x14] sm:$0xf]
      %v1945 = vld [vmem:[%s1938 + $0x18] sm:$0xf]
      %v1946 = vld [vmem:[%s1938 + $0x1c] sm:$0xf]
      %v1947 = vld [vmem:[%s1938 + $0x20] sm:$0xf]
      %v1948 = vld [vmem:[%s1938 + $0x24] sm:$0xf]
      %v1949 = vld [vmem:[%s1938 + $0x28] sm:$0xf]
      %v1950 = vld [vmem:[%s1938 + $0x2c] sm:$0xf]
      %v1951 = vld [vmem:[%s1938 + $0x30] sm:$0xf]
      %v1952 = vld [vmem:[%s1938 + $0x34] sm:$0xf]
      %v1953 = vld [vmem:[%s1938 + $0x38] sm:$0xf]
      %v1954 = vld [vmem:[%s1938 + $0x3c] sm:$0xf]
      %v1955 = vld [vmem:[%s1938 + $0x40] sm:$0xf]
      %v1956 = vld [vmem:[%s1938 + $0x44] sm:$0xf]
      %v1957 = vld [vmem:[%s1938 + $0x48] sm:$0xf]
      %v1958 = vld [vmem:[%s1938 + $0x4c] sm:$0xf]
      %v1959 = vld [vmem:[%s1938 + $0x50] sm:$0xf]
      %v1960 = vld [vmem:[%s1938 + $0x54] sm:$0xf]
      %v1961 = vld [vmem:[%s1938 + $0x58] sm:$0xf]
      %v1962 = vld [vmem:[%s1938 + $0x5c] sm:$0xf]
      %v1963 = vld [vmem:[%s1938 + $0x60] sm:$0xf]
      %v1964 = vld [vmem:[%s1938 + $0x64] sm:$0xf]
      %v1965 = vld [vmem:[%s1938 + $0x68] sm:$0xf]
      %v1966 = vld [vmem:[%s1938 + $0x6c] sm:$0xf]
      %v1967 = vld [vmem:[%s1938 + $0x70] sm:$0xf]
      %v1968 = vld [vmem:[%s1938 + $0x74] sm:$0xf]
      %v1969 = vld [vmem:[%s1938 + $0x78] sm:$0xf]
      %v1970 = vld [vmem:[%s1938 + $0x7c] sm:$0xf]
      %v1971 = vld [vmem:[%s1938 + $0x80] sm:$0xf]
      %v1972 = vld [vmem:[%s1938 + $0x84] sm:$0xf]
      %v1973 = vld [vmem:[%s1938 + $0x88] sm:$0xf]
      %v1974 = vld [vmem:[%s1938 + $0x8c] sm:$0xf]
      %v1975 = vld [vmem:[%s1938 + $0x90] sm:$0xf]
      %v1976 = vld [vmem:[%s1938 + $0x94] sm:$0xf]
      %v1977 = vld [vmem:[%s1938 + $0x98] sm:$0xf]
      %v1978 = vld [vmem:[%s1938 + $0x9c] sm:$0xf]
      %v1979 = vld [vmem:[%s1938 + $0xa0] sm:$0xf]
      %v1980 = vld [vmem:[%s1938 + $0xa4] sm:$0xf]
      %v1981 = vld [vmem:[%s1938 + $0xa8] sm:$0xf]
      %v1982 = vld [vmem:[%s1938 + $0xac] sm:$0xf]
      %v1983 = vld [vmem:[%s1938 + $0xb0] sm:$0xf]
      %v1984 = vld [vmem:[%s1938 + $0xb4] sm:$0xf]
      %v1985 = vld [vmem:[%s1938 + $0xb8] sm:$0xf]
      %v1986 = vld [vmem:[%s1938 + $0xbc] sm:$0xf]
      %v1987 = vunpack.c.l.b16 %v1874
      %v1988 = vunpack.c.h.b16 %v1874
      %v1989 = vunpack.c.l.b16 %v1883
      %v1990 = vunpack.c.l.b16 %v1892
      %v1991 = vunpack.c.h.b16 %v1892
      %v1992 = vunpack.c.l.b16 %v1901
      %v1993 = vunpack.c.l.b16 %v1910
      %v1994 = vunpack.c.h.b16 %v1910
      %v1995 = vunpack.c.l.b16 %v1919
      %v1996 = vunpack.c.l.b16 %v1928
      %v1997 = vunpack.c.h.b16 %v1928
      %v1998 = vunpack.c.l.b16 %v1937
      %v1999 = vpack.c.b16 %v1990, %v1987
      %v2000 = vpack.c.b16 %v1991, %v1988
      %v2001 = vpack.c.b16 %v1992, %v1989
      %v2002 = vpack.c.b16 %v1996, %v1993
      %v2003 = vpack.c.b16 %v1997, %v1994
      %v2004 = vpack.c.b16 %v1998, %v1995
      %v2059 = vunpack.c.l.b16 %v1939
      %v2060 = vunpack.c.l.b16 %v1940
      %v2061 = vunpack.c.l.b16 %v1941
      %v2062 = vunpack.c.l.b16 %v1942
      %v2063 = vunpack.c.l.b16 %v1943
      %v2064 = vunpack.c.l.b16 %v1944
      %v2065 = vunpack.c.l.b16 %v1945
      %v2066 = vunpack.c.l.b16 %v1946
      %v2067 = vunpack.c.l.b16 %v1947
      %v2068 = vunpack.c.l.b16 %v1948
      %v2069 = vunpack.c.l.b16 %v1949
      %v2070 = vunpack.c.l.b16 %v1950
      %v2071 = vunpack.c.l.b16 %v1951
      %v2072 = vunpack.c.l.b16 %v1952
      %v2073 = vunpack.c.l.b16 %v1953
      %v2074 = vunpack.c.l.b16 %v1954
      %v2075 = vunpack.c.l.b16 %v1955
      %v2076 = vunpack.c.l.b16 %v1956
      %v2077 = vunpack.c.l.b16 %v1957
      %v2078 = vunpack.c.l.b16 %v1958
      %v2079 = vunpack.c.l.b16 %v1959
      %v2080 = vunpack.c.l.b16 %v1960
      %v2081 = vunpack.c.l.b16 %v1961
      %v2082 = vunpack.c.l.b16 %v1962
      %v2083 = vunpack.c.l.b16 %v1963
      %v2084 = vunpack.c.l.b16 %v1964
      %v2085 = vunpack.c.l.b16 %v1965
      %v2086 = vunpack.c.l.b16 %v1966
      %v2087 = vunpack.c.l.b16 %v1967
      %v2088 = vunpack.c.l.b16 %v1968
      %v2089 = vunpack.c.l.b16 %v1969
      %v2090 = vunpack.c.l.b16 %v1970
      %v2091 = vunpack.c.l.b16 %v1971
      %v2092 = vunpack.c.l.b16 %v1972
      %v2093 = vunpack.c.l.b16 %v1973
      %v2094 = vunpack.c.l.b16 %v1974
      %v2095 = vunpack.c.l.b16 %v1975
      %v2096 = vunpack.c.l.b16 %v1976
      %v2097 = vunpack.c.l.b16 %v1977
      %v2098 = vunpack.c.l.b16 %v1978
      %v2099 = vunpack.c.l.b16 %v1979
      %v2100 = vunpack.c.l.b16 %v1980
      %v2101 = vunpack.c.l.b16 %v1981
      %v2102 = vunpack.c.l.b16 %v1982
      %v2103 = vunpack.c.l.b16 %v1983
      %v2104 = vunpack.c.l.b16 %v1984
      %v2105 = vunpack.c.l.b16 %v1985
      %v2106 = vunpack.c.l.b16 %v1986
      %v2107 = vpack.c.b16 %v2060, %v2059
      %v2108 = vpack.c.b16 %v2062, %v2061
      %v2109 = vpack.c.b16 %v2064, %v2063
      %v2110 = vpack.c.b16 %v2066, %v2065
      %v2111 = vpack.c.b16 %v2068, %v2067
      %v2112 = vpack.c.b16 %v2070, %v2069
      %v2113 = vpack.c.b16 %v2072, %v2071
      %v2114 = vpack.c.b16 %v2074, %v2073
      %v2115 = vpack.c.b16 %v2076, %v2075
      %v2116 = vpack.c.b16 %v2078, %v2077
      %v2117 = vpack.c.b16 %v2080, %v2079
      %v2118 = vpack.c.b16 %v2082, %v2081
      %v2119 = vpack.c.b16 %v2084, %v2083
      %v2120 = vpack.c.b16 %v2086, %v2085
      %v2121 = vpack.c.b16 %v2088, %v2087
      %v2122 = vpack.c.b16 %v2090, %v2089
      %v2123 = vpack.c.b16 %v2092, %v2091
      %v2124 = vpack.c.b16 %v2094, %v2093
      %v2125 = vpack.c.b16 %v2096, %v2095
      %v2126 = vpack.c.b16 %v2098, %v2097
      %v2127 = vpack.c.b16 %v2100, %v2099
      %v2128 = vpack.c.b16 %v2102, %v2101
      %v2129 = vpack.c.b16 %v2104, %v2103
      %v2130 = vpack.c.b16 %v2106, %v2105
      %2155 = vmatprep.subr.bf16.mxu0 0
      %2156 = vmatpush1.bf16.msra.mxu0 %v2114
      %2157 = vmatprep.subr.bf16.mxu0 0
      %2158 = vmatpush1.bf16.msra.mxu0 %v2113
      %2159 = vmatprep.subr.bf16.mxu0 0
      %2160 = vmatpush1.bf16.msra.mxu0 %v2112
      %2161 = vmatprep.subr.bf16.mxu0 0
      %2162 = vmatpush1.bf16.msra.mxu0 %v2111
      %2163 = vmatprep.subr.bf16.mxu0 0
      %2164 = vmatpush1.bf16.msra.mxu0 %v2110
      %2165 = vmatprep.subr.bf16.mxu0 0
      %2166 = vmatpush1.bf16.msra.mxu0 %v2109
      %2167 = vmatprep.subr.bf16.mxu0 0
      %2168 = vmatpush1.bf16.msra.mxu0 %v2108
      %2169 = vmatprep.subr.bf16.mxu0 0
      %2170 = vmatpush1.bf16.msra.mxu0 %v2107
      %2171 = vmatprep.subr.bf16.mxu0 0
      %2172 = vmatpush2.bf16.msra.mxu0 %v2122
      %2173 = vmatprep.subr.bf16.mxu0 0
      %2174 = vmatpush2.bf16.msra.mxu0 %v2121
      %2175 = vmatprep.subr.bf16.mxu0 0
      %2176 = vmatpush2.bf16.msra.mxu0 %v2120
      %2177 = vmatprep.subr.bf16.mxu0 0
      %2178 = vmatpush2.bf16.msra.mxu0 %v2119
      %2179 = vmatprep.subr.bf16.mxu0 0
      %2180 = vmatpush2.bf16.msra.mxu0 %v2118
      %2181 = vmatprep.subr.bf16.mxu0 0
      %2182 = vmatpush2.bf16.msra.mxu0 %v2117
      %2183 = vmatprep.subr.bf16.mxu0 0
      %2184 = vmatpush2.bf16.msra.mxu0 %v2116
      %2185 = vmatprep.subr.bf16.mxu0 0
      %2186 = vmatpush2.bf16.msra.mxu0 %v2115
      %2187 = vmatprep.mubr.bf16.mxu0 %v2000
      %2188 = vmatmul.mubr.bf16.gmra.mxu0 %v1999
      %v2189 = vpop.f32.mrf.mxu0
      %v2190 = vadd.f32 0.0, %v2189
      %v2191 = vpop.f32.mrf.mxu0
      %v2192 = vpop.f32.mrf.mxu0
      %v2193 = vadd.f32 0.0, %v2192
      %v2194 = vpop.f32.mrf.mxu0
      %2195 = vmatprep.mubr.bf16.mxu0 %v2003
      %2196 = vmatmul.mubr.bf16.gmra.mxu0 %v2002
      %v2197 = vpop.f32.mrf.mxu0
      %v2198 = vadd.f32 0.0, %v2197
      %v2199 = vpop.f32.mrf.mxu0
      %v2200 = vpop.f32.mrf.mxu0
      %v2201 = vadd.f32 0.0, %v2200
      %v2202 = vpop.f32.mrf.mxu0
      %2203 = vdwg.mxu0
      %2204 = vmatprep.subr.bf16.mxu0 0
      %2205 = vmatpush1.bf16.msra.mxu0 %v2130
      %2206 = vmatprep.subr.bf16.mxu0 0
      %2207 = vmatpush1.bf16.msra.mxu0 %v2129
      %2208 = vmatprep.subr.bf16.mxu0 0
      %2209 = vmatpush1.bf16.msra.mxu0 %v2128
      %2210 = vmatprep.subr.bf16.mxu0 0
      %2211 = vmatpush1.bf16.msra.mxu0 %v2127
      %2212 = vmatprep.subr.bf16.mxu0 0
      %2213 = vmatpush1.bf16.msra.mxu0 %v2126
      %2214 = vmatprep.subr.bf16.mxu0 0
      %2215 = vmatpush1.bf16.msra.mxu0 %v2125
      %2216 = vmatprep.subr.bf16.mxu0 0
      %2217 = vmatpush1.bf16.msra.mxu0 %v2124
      %2218 = vmatprep.subr.bf16.mxu0 0
      %2219 = vmatpush1.bf16.msra.mxu0 %v2123
      %2220 = vmatprep.subr.bf16.mxu0 0
      %2221 = vmatpush2.bf16.msra.mxu0 0
      %2222 = vmatprep.subr.bf16.mxu0 0
      %2223 = vmatpush2.bf16.msra.mxu0 0
      %2224 = vmatprep.subr.bf16.mxu0 0
      %2225 = vmatpush2.bf16.msra.mxu0 0
      %2226 = vmatprep.subr.bf16.mxu0 0
      %2227 = vmatpush2.bf16.msra.mxu0 0
      %2228 = vmatprep.subr.bf16.mxu0 0
      %2229 = vmatpush2.bf16.msra.mxu0 0
      %2230 = vmatprep.subr.bf16.mxu0 0
      %2231 = vmatpush2.bf16.msra.mxu0 0
      %2232 = vmatprep.subr.bf16.mxu0 0
      %2233 = vmatpush2.bf16.msra.mxu0 0
      %2234 = vmatprep.subr.bf16.mxu0 0
      %2235 = vmatpush2.bf16.msra.mxu0 0
      %2236 = vmatprep.mubr.bf16.mxu0 0
      %2237 = vmatmul.mubr.bf16.gmra.mxu0 %v2001
      %v2238 = vpop.f32.mrf.mxu0
      %v2239 = vadd.f32 %v2190, %v2238
      %v2240 = vpop.f32.mrf.mxu0
      %v2241 = vpop.f32.mrf.mxu0
      %v2242 = vadd.f32 %v2193, %v2241
      %v2243 = vpop.f32.mrf.mxu0
      %2244 = vmatprep.mubr.bf16.mxu0 0
      %2245 = vmatmul.mubr.bf16.gmra.mxu0 %v2004
      %v2246 = vpop.f32.mrf.mxu0
      %v2247 = vadd.f32 %v2198, %v2246
      %v2248 = vpop.f32.mrf.mxu0
      %v2249 = vpop.f32.mrf.mxu0
      %v2250 = vadd.f32 %v2201, %v2249
      %v2251 = vpop.f32.mrf.mxu0
      %2252 = vdwg.mxu0
      %v2253 = vadd.f32 %v1854, %v2239
      %v2254 = vadd.f32 %v1855, %v2242
      %v2255 = vadd.f32 %v1856, %v2247
      %v2256 = vadd.f32 %v1857, %v2250
      %v2257 = vld [vmem:[%s5] sm:$0x1]
      %v2259 = vlaneseq
      %v2260 = vshrl.u32 %v2259, 7
      %v2261 = vsub.s32 0, %v2260
      %v2262 = vrot.slane %v2257, %v2261
      %v2264 = vadd.f32 %v2253, %v2262
      %v2265 = vadd.f32 %v2254, %v2262
      %v2266 = vadd.f32 %v2255, %v2262
      %v2267 = vadd.f32 %v2256, %v2262
      %v2268 = vmax.f32 %v2264, 0.0
      %v2269 = vmax.f32 %v2265, 0.0
      %v2270 = vmax.f32 %v2266, 0.0
      %v2271 = vmax.f32 %v2267, 0.0
      %v2272 = vpack.c.bf16 %v2268, %v2268
      %v2273 = vpack.c.bf16 %v2269, %v2269
      %v2274 = vpack.c.bf16 %v2270, %v2270
      %v2275 = vpack.c.bf16 %v2271, %v2271
      %2276 = vst [vmem:[%s287] sm:$0xf] %v2272
      %2277 = vst [vmem:[%s287 + $0x4] sm:$0xf] %v2273
      %2278 = vst [vmem:[%s287 + $0x8] sm:$0xf] %v2274
      %2279 = vst [vmem:[%s287 + $0xc] sm:$0xf] %v2275
      %s2280 = smul.u32 4, %s22
      %p2281 = scmp.lt.s32.totalorder %s21, 1
      %s2282 = scalar_select %p2281, %s21, 1
      %p2283 = scmp.lt.s32.totalorder %s2280, 7
      %s2284 = scalar_select %p2283, %s2280, 7
      %s2285 = smul.addr %s2282, 8
      %s2286 = sadd.s32 %s2284, %s2285
      %s2287 = smul.addr %s2286, 4
      %s2288 = scalar_lea.vmem %s6, %s2287
      // Predicated region
      $region53: #{forward.1} parent=43 // pred_check
        %p2289 = pneg %p182
      $region54: #{forward.1} parent=43 // pred_check_branch
        %2291 = sbr.rel (%p2289) target = $region56
      $region55: #{forward.1} parent=43 // pred_region
        %s2292 = smul.u32 4, %s22
      $region56: #{forward.1} parent=43 // pred_fallthru
        _
    $region44: #{forward.1} parent=5 // pred_fallthru
      _
    %p2293 = scmp.le.s32.totalorder 2, %s12
    // Predicated region
    $region57: #{forward.1} parent=5 // pred_check
      %p2294 = pneg %p2293
    $region58: #{forward.1} parent=5 // pred_check_branch
      %2296 = sbr.rel (%p2294) target = $region60
    $region59: #{forward.1} parent=5 // pred_region
      %s2297 = ssub.s32 %s12, 2
      // Predicated region
      $region61: #{forward.1} parent=59 // pred_check
        %p2298 = pneg %p188
      $region62: #{forward.1} parent=59 // pred_check_branch
        %2300 = sbr.rel (%p2298) target = $region64
      $region63: #{forward.1} parent=59 // pred_region
        %s2301 = smul.u32 4, %s24
        %p2302 = scmp.lt.s32.totalorder %s23, 1
        %s2303 = scalar_select %p2302, %s23, 1
        %p2304 = scmp.lt.s32.totalorder %s2301, 7
        %s2305 = scalar_select %p2304, %s2301, 7
        %s2306 = smul.addr %s2303, 8
        %s2307 = sadd.s32 %s2305, %s2306
        %s2308 = smul.addr %s2307, 4
        %s2309 = scalar_lea.vmem %s6, %s2308
      $region64: #{forward.1} parent=59 // pred_fallthru
        _
    $region60: #{forward.1} parent=5 // pred_fallthru
      _
  $region6: #{forward.1} parent=0 // loop_footer
    %s16 = sadd.s32 1, %s12
  $region7: #{forward.1} parent=0 // loop_footer_branch
    %11 = sbr.rel target = $region3
  $region8: #{forward.1} parent=0 // loop_exit
    _

</llo_original>
